<compile_context>
chip_gen: v5e
topology: v5e:2x2
jax: 0.10.0
libtpu: 0.0.40
codegen_flags: <defaults>
</compile_context>

<pallas_src>
import math
from functools import partial

import jax
import jax.numpy as jnp
from jax.experimental import pallas as pl
from jax.experimental.pallas import tpu as pltpu


# -----------------------------------------------------------------------------
# Fused Block kernel: 3x3 conv (single bf16 MXU matmul, f32 accum) + bias
#                     + GroupNorm + scale/shift + SiLU
# -----------------------------------------------------------------------------
def _block_kernel(x_ref, w_ref, gmat_ref, b_ref, g_ref, bt_ref, *rest,
                  channels_per_group, has_scale_shift):
    # x_ref    : (1, H+2, W+2, Cin) bf16  padded NHWC sample
    # w_ref    : (9*Cin, CB)        bf16  weight-standardized taps (kh,kw,Cin major)
    # gmat_ref : (CB, CB)           f32   block-diagonal group-mixing matrix
    # b_ref, g_ref, bt_ref : (1, CB) f32  bias / gamma / beta
    # sc_ref, sh_ref : (1, 1, CB)   f32   per-sample scale / shift (optional)
    # o_ref    : (1, H, W, CB)
    if has_scale_shift:
        sc_ref, sh_ref, o_ref = rest
    else:
        (o_ref,) = rest

    _, H, W, CB = o_ref.shape
    Cin = x_ref.shape[-1]
    HW = H * W

    # ---- im2col in VMEM ---------------------------------------------------
    # Three column-shifted views are the only unaligned-sublane slices (VMEM/XLU
    # copies, no extra HBM traffic); row taps are free leading-axis slices.
    cols = [x_ref[0, :, kj:kj + W, :] for kj in range(3)]       # (H+2, W, Cin) each
    taps = []
    for ki in range(3):
        for kj in range(3):
            taps.append(cols[kj][ki:ki + H].reshape(HW, Cin))
    a = jnp.concatenate(taps, axis=-1)                           # (HW, 9*Cin) bf16

    # ---- single K = 9*Cin MXU matmul, f32 accumulation ---------------------
    y = jnp.dot(a, w_ref[...], preferred_element_type=jnp.float32)  # (HW, CB) f32
    y = y + b_ref[...]                                               # bias

    # ---- fused GroupNorm (centered two-pass stats, sample resident) --------
    n = float(channels_per_group * HW)
    s1 = jnp.sum(y, axis=0, keepdims=True)                          # (1, CB)
    mean = jnp.dot(s1, gmat_ref[...], preferred_element_type=jnp.float32) / n
    yc = y - mean
    s2 = jnp.sum(yc * yc, axis=0, keepdims=True)                    # (1, CB)
    var = jnp.dot(s2, gmat_ref[...], preferred_element_type=jnp.float32) / n
    y = yc * jax.lax.rsqrt(var + 1e-5)
    y = y * g_ref[...] + bt_ref[...]

    # ---- scale/shift + SiLU epilogue (f32; exp + approx recip -> EUP) ------
    if has_scale_shift:
        y = y * (sc_ref[0] + 1.0) + sh_ref[0]
    y = y * pl.reciprocal(1.0 + jnp.exp(-y), approx=True)

    o_ref[...] = y.reshape(1, H, W, CB).astype(o_ref.dtype)


def _choose_cout_block(cout, cpg, target=256):
    """Largest divisor of cout that is a multiple of lcm(128, cpg) and <= target."""
    base = 128 * cpg // math.gcd(128, cpg)
    if cout % base != 0:
        return cout
    best = None
    cb = base
    while cb <= min(target, cout):
        if cout % cb == 0:
            best = cb
        cb += base
    return best if best is not None else cout


def block_forward(params, x, scale_shift=None, *, groups=8,
                  out_dtype=jnp.float32, channels_last_out=False):
    """Fused Block forward. x: (B, Cin, H, W) f32 NCHW -> (B, Cout, H, W)."""
    w, b = params["w"], params["b"]
    gamma, beta = params["gamma"], params["beta"]
    Cout, Cin, kh, kw = w.shape
    B, C, H, W = x.shape
    assert (kh, kw) == (3, 3) and C == Cin
    assert Cout % groups == 0
    cpg = Cout // groups
    assert W % 8 == 0, "W must be a multiple of 8 for a layout-free kernel"
    assert Cin % 128 == 0 and Cout % 128 == 0, "channels must be multiples of 128"

    # Weight standardization (tiny reduction; plain JAX), tap-major bf16 layout.
    mu = jnp.mean(w, axis=(1, 2, 3), keepdims=True)
    var = jnp.var(w, axis=(1, 2, 3), keepdims=True)
    wn = (w - mu) * jax.lax.rsqrt(var + 1e-5)
    # (Cout, Cin, 3, 3) -> (kh, kw, Cin, Cout) -> (9*Cin, Cout), bf16
    w_flat = jnp.transpose(wn, (2, 3, 1, 0)).reshape(9 * Cin, Cout).astype(jnp.bfloat16)

    # NHWC bf16 + 1-pixel spatial zero pad (one fused relayout pass in XLA).
    xh = jnp.transpose(x, (0, 2, 3, 1)).astype(jnp.bfloat16)        # (B, H, W, Cin)
    xp = jnp.pad(xh, ((0, 0), (1, 1), (1, 1), (0, 0)))              # (B, H+2, W+2, Cin)

    # Channel-block grid axis (whole groups, >=128 lanes) for v7x megacore
    # occupancy at small batch; degenerates to one block at small Cout.
    CB = _choose_cout_block(Cout, cpg)
    NCB = Cout // CB

    # Block-diagonal group-mixing matrix: compile-time constant, hoisted here.
    gidx = jnp.arange(CB) // cpg
    gmat = (gidx[:, None] == gidx[None, :]).astype(jnp.float32)     # (CB, CB)

    b2 = b.reshape(1, Cout).astype(jnp.float32)
    g2 = gamma.reshape(1, Cout).astype(jnp.float32)
    bt2 = beta.reshape(1, Cout).astype(jnp.float32)

    has_ss = scale_shift is not None
    in_specs = [
        pl.BlockSpec((1, H + 2, W + 2, Cin), lambda bi, ci: (bi, 0, 0, 0)),
        pl.BlockSpec((9 * Cin, CB), lambda bi, ci: (0, ci)),
        pl.BlockSpec((CB, CB), lambda bi, ci: (0, 0)),
        pl.BlockSpec((1, CB), lambda bi, ci: (0, ci)),
        pl.BlockSpec((1, CB), lambda bi, ci: (0, ci)),
        pl.BlockSpec((1, CB), lambda bi, ci: (0, ci)),
    ]
    args = [xp, w_flat, gmat, b2, g2, bt2]
    if has_ss:
        scale, shift = scale_shift
        sc3 = scale.reshape(B, 1, Cout).astype(jnp.float32)
        sh3 = shift.reshape(B, 1, Cout).astype(jnp.float32)
        in_specs += [pl.BlockSpec((1, 1, CB), lambda bi, ci: (bi, 0, ci)),
                     pl.BlockSpec((1, 1, CB), lambda bi, ci: (bi, 0, ci))]
        args += [sc3, sh3]

    out_bytes = jnp.dtype(out_dtype).itemsize

    # Explicit VMEM budget for this design (double-buffered blocks + in-kernel values).
    vmem_need = (
        2 * ((H + 2) * (W + 2) * Cin * 2       # input block
             + 9 * Cin * CB * 2                # weight block
             + CB * CB * 4                     # group-mixing matrix
             + H * W * CB * out_bytes          # output block
             + 8 * CB * 4)                     # per-channel params
        + H * W * 9 * Cin * 2                  # im2col A matrix
        + 4 * H * W * CB * 4                   # f32 activations / temporaries
    )
    vmem_limit = int(min(max(vmem_need * 3 // 2, 16 * 1024 * 1024), 64 * 1024 * 1024))

    flops = 2 * B * H * W * 9 * Cin * Cout
    transcendentals = B * H * W * Cout
    bytes_accessed = (xp.size * 2 + w_flat.size * 2 + B * H * W * Cout * out_bytes
                      + (3 * Cout + (2 * B * Cout if has_ss else 0)) * 4)

    out_nhwc = pl.pallas_call(
        partial(_block_kernel, channels_per_group=cpg, has_scale_shift=has_ss),
        out_shape=jax.ShapeDtypeStruct((B, H, W, Cout), out_dtype),
        grid=(B, NCB),
        in_specs=in_specs,
        out_specs=pl.BlockSpec((1, H, W, CB), lambda bi, ci: (bi, 0, 0, ci)),
        compiler_params=pltpu.CompilerParams(
            dimension_semantics=("parallel", "parallel"),
            vmem_limit_bytes=vmem_limit,
        ),
        cost_estimate=pl.CostEstimate(flops=flops,
                                      transcendentals=transcendentals,
                                      bytes_accessed=bytes_accessed),
    )(*args)

    if channels_last_out:
        return out_nhwc
    return jnp.transpose(out_nhwc, (0, 3, 1, 2))


# -----------------------------------------------------------------------------
# Plain-JAX reference (f32 end to end) for a correctness check
# -----------------------------------------------------------------------------
def block_reference(params, x, scale_shift, groups):
    w, b = params["w"], params["b"]
    mu = jnp.mean(w, axis=(1, 2, 3), keepdims=True)
    var = jnp.var(w, axis=(1, 2, 3), keepdims=True)
    wn = (w - mu) * jax.lax.rsqrt(var + 1e-5)
    y = jax.lax.conv_general_dilated(
        x, wn, (1, 1), ((1, 1), (1, 1)),
        dimension_numbers=("NCHW", "OIHW", "NCHW"))
    y = y + b[None, :, None, None]
    B, C, H, W = y.shape
    yg = y.reshape(B, groups, C // groups, H, W)
    m = jnp.mean(yg, axis=(2, 3, 4), keepdims=True)
    v = jnp.var(yg, axis=(2, 3, 4), keepdims=True)
    yn = ((yg - m) * jax.lax.rsqrt(v + 1e-5)).reshape(B, C, H, W)
    yn = yn * params["gamma"][None, :, None, None] + params["beta"][None, :, None, None]
    if scale_shift is not None:
        scale, shift = scale_shift
        yn = yn * (scale + 1.0) + shift
    return yn * jax.nn.sigmoid(yn)


# -----------------------------------------------------------------------------
# Main
# -----------------------------------------------------------------------------
if __name__ == "__main__":
    B, DIM, DIM_OUT, GROUPS, H, W = 2, 128, 128, 8, 16, 16

    keys = jax.random.split(jax.random.PRNGKey(0), 8)
    x = jax.random.normal(keys[0], (B, DIM, H, W), jnp.float32)
    w = jax.random.normal(keys[1], (DIM_OUT, DIM, 3, 3), jnp.float32) / math.sqrt(DIM * 9)
    b = 0.02 * jax.random.normal(keys[2], (DIM_OUT,), jnp.float32)
    gamma = 1.0 + 0.1 * jax.random.normal(keys[3], (DIM_OUT,), jnp.float32)
    beta = 0.1 * jax.random.normal(keys[4], (DIM_OUT,), jnp.float32)
    scale = 0.1 * jax.random.normal(keys[5], (B, DIM_OUT, 1, 1), jnp.float32)
    shift = 0.1 * jax.random.normal(keys[6], (B, DIM_OUT, 1, 1), jnp.float32)
    params = {"w": w, "b": b, "gamma": gamma, "beta": beta}

    fwd = jax.jit(partial(block_forward, groups=GROUPS))
    out = jax.block_until_ready(fwd(params, x, (scale, shift)))

    assert out.shape == (B, DIM_OUT, H, W), out.shape
    assert bool(jnp.all(jnp.isfinite(out)))

    ref = block_reference(params, x, (scale, shift), GROUPS)
    err = float(jnp.max(jnp.abs(out - ref)))
    assert err < 5e-2, f"max abs error vs reference too large: {err}"

    print("KERNEL_OK")
</pallas_src>

<mosaic_0001>
module attributes {stable_mosaic.version = 11 : i64} {
  func.func @_block_kernel(%arg0: i32, %arg1: i32, %arg2: memref<1x18x18x128xbf16, #tpu.memory_space<vmem>>, %arg3: memref<1152x128xbf16, #tpu.memory_space<vmem>>, %arg4: memref<128x128xf32, #tpu.memory_space<vmem>>, %arg5: memref<1x128xf32, #tpu.memory_space<vmem>>, %arg6: memref<1x128xf32, #tpu.memory_space<vmem>>, %arg7: memref<1x128xf32, #tpu.memory_space<vmem>>, %arg8: memref<1x1x128xf32, #tpu.memory_space<vmem>>, %arg9: memref<1x1x128xf32, #tpu.memory_space<vmem>>, %arg10: memref<1x16x16x128xf32, #tpu.memory_space<vmem>>) attributes {dimension_semantics = [#tpu.dimension_semantics<parallel>, #tpu.dimension_semantics<parallel>], iteration_bounds = array<i64: 2, 1>, scalar_prefetch = 0 : i64, scratch_operands = 0 : i64, tpu.core_type = #tpu.core_type<tc>, window_params = [{transform_indices = @transform_0, window_bounds = array<i64: 1, 18, 18, 128>}, {transform_indices = @transform_1, window_bounds = array<i64: 1152, 128>}, {pipeline_mode = #tpu.pipeline_mode<synchronous>, transform_indices = @transform_2, window_bounds = array<i64: 128, 128>}, {transform_indices = @transform_3, window_bounds = array<i64: 1, 128>}, {transform_indices = @transform_4, window_bounds = array<i64: 1, 128>}, {transform_indices = @transform_5, window_bounds = array<i64: 1, 128>}, {transform_indices = @transform_6, window_bounds = array<i64: 1, 1, 128>}, {transform_indices = @transform_7, window_bounds = array<i64: 1, 1, 128>}, {transform_indices = @transform_8, window_bounds = array<i64: 1, 16, 16, 128>}]} {
    %c0 = arith.constant 0 : index
    %c0_0 = arith.constant 0 : index
    %c0_1 = arith.constant 0 : index
    %c0_2 = arith.constant 0 : index
    %0 = vector.load %arg2[%c0, %c0_0, %c0_1, %c0_2] : memref<1x18x18x128xbf16, #tpu.memory_space<vmem>>, vector<1x18x16x128xbf16>
    %1 = vector.shape_cast %0 : vector<1x18x16x128xbf16> to vector<18x16x128xbf16>
    %c0_3 = arith.constant 0 : index
    %c0_4 = arith.constant 0 : index
    %c1 = arith.constant 1 : index
    %c0_5 = arith.constant 0 : index
    %2 = vector.load %arg2[%c0_3, %c0_4, %c1, %c0_5] : memref<1x18x18x128xbf16, #tpu.memory_space<vmem>>, vector<1x18x16x128xbf16>
    %3 = vector.shape_cast %2 : vector<1x18x16x128xbf16> to vector<18x16x128xbf16>
    %c0_6 = arith.constant 0 : index
    %c0_7 = arith.constant 0 : index
    %c2 = arith.constant 2 : index
    %c0_8 = arith.constant 0 : index
    %4 = vector.load %arg2[%c0_6, %c0_7, %c2, %c0_8] : memref<1x18x18x128xbf16, #tpu.memory_space<vmem>>, vector<1x18x16x128xbf16>
    %5 = vector.shape_cast %4 : vector<1x18x16x128xbf16> to vector<18x16x128xbf16>
    %6 = vector.extract_strided_slice %1 {offsets = [0, 0, 0], sizes = [16, 16, 128], strides = [1, 1, 1]} : vector<18x16x128xbf16> to vector<16x16x128xbf16>
    %7 = vector.shape_cast %6 : vector<16x16x128xbf16> to vector<256x128xbf16>
    %8 = vector.extract_strided_slice %3 {offsets = [0, 0, 0], sizes = [16, 16, 128], strides = [1, 1, 1]} : vector<18x16x128xbf16> to vector<16x16x128xbf16>
    %9 = vector.shape_cast %8 : vector<16x16x128xbf16> to vector<256x128xbf16>
    %10 = vector.extract_strided_slice %5 {offsets = [0, 0, 0], sizes = [16, 16, 128], strides = [1, 1, 1]} : vector<18x16x128xbf16> to vector<16x16x128xbf16>
    %11 = vector.shape_cast %10 : vector<16x16x128xbf16> to vector<256x128xbf16>
    %12 = vector.extract_strided_slice %1 {offsets = [1, 0, 0], sizes = [16, 16, 128], strides = [1, 1, 1]} : vector<18x16x128xbf16> to vector<16x16x128xbf16>
    %13 = vector.shape_cast %12 : vector<16x16x128xbf16> to vector<256x128xbf16>
    %14 = vector.extract_strided_slice %3 {offsets = [1, 0, 0], sizes = [16, 16, 128], strides = [1, 1, 1]} : vector<18x16x128xbf16> to vector<16x16x128xbf16>
    %15 = vector.shape_cast %14 : vector<16x16x128xbf16> to vector<256x128xbf16>
    %16 = vector.extract_strided_slice %5 {offsets = [1, 0, 0], sizes = [16, 16, 128], strides = [1, 1, 1]} : vector<18x16x128xbf16> to vector<16x16x128xbf16>
    %17 = vector.shape_cast %16 : vector<16x16x128xbf16> to vector<256x128xbf16>
    %18 = vector.extract_strided_slice %1 {offsets = [2, 0, 0], sizes = [16, 16, 128], strides = [1, 1, 1]} : vector<18x16x128xbf16> to vector<16x16x128xbf16>
    %19 = vector.shape_cast %18 : vector<16x16x128xbf16> to vector<256x128xbf16>
    %20 = vector.extract_strided_slice %3 {offsets = [2, 0, 0], sizes = [16, 16, 128], strides = [1, 1, 1]} : vector<18x16x128xbf16> to vector<16x16x128xbf16>
    %21 = vector.shape_cast %20 : vector<16x16x128xbf16> to vector<256x128xbf16>
    %22 = vector.extract_strided_slice %5 {offsets = [2, 0, 0], sizes = [16, 16, 128], strides = [1, 1, 1]} : vector<18x16x128xbf16> to vector<16x16x128xbf16>
    %23 = vector.shape_cast %22 : vector<16x16x128xbf16> to vector<256x128xbf16>
    %24 = tpu.concatenate %7, %9, %11, %13, %15, %17, %19, %21, %23 in 1 : vector<256x128xbf16>, vector<256x128xbf16>, vector<256x128xbf16>, vector<256x128xbf16>, vector<256x128xbf16>, vector<256x128xbf16>, vector<256x128xbf16>, vector<256x128xbf16>, vector<256x128xbf16> -> vector<256x1152xbf16>
    %c0_9 = arith.constant 0 : index
    %c0_10 = arith.constant 0 : index
    %25 = vector.load %arg3[%c0_9, %c0_10] : memref<1152x128xbf16, #tpu.memory_space<vmem>>, vector<1152x128xbf16>
    %cst = arith.constant dense<0.000000e+00> : vector<256x128xf32>
    %26 = tpu.matmul %24, %25, %cst {dimension_numbers = #tpu.dot_dimension_numbers<[1], [0], [0], [1], [0, 0, 1, 1], [], []>} : vector<256x1152xbf16>, vector<1152x128xbf16>, vector<256x128xf32> -> vector<256x128xf32>
    %c0_11 = arith.constant 0 : index
    %c0_12 = arith.constant 0 : index
    %27 = vector.load %arg5[%c0_11, %c0_12] : memref<1x128xf32, #tpu.memory_space<vmem>>, vector<1x128xf32>
    %28 = vector.broadcast %27 : vector<1x128xf32> to vector<256x128xf32>
    %29 = arith.addf %26, %28 : vector<256x128xf32>
    %cst_13 = arith.constant dense<0.000000e+00> : vector<128xf32>
    %30 = vector.multi_reduction <add>, %29, %cst_13 [0] : vector<256x128xf32> to vector<128xf32>
    %31 = vector.shape_cast %30 : vector<128xf32> to vector<1x128xf32>
    %c0_14 = arith.constant 0 : index
    %c0_15 = arith.constant 0 : index
    %32 = vector.load %arg4[%c0_14, %c0_15] : memref<128x128xf32, #tpu.memory_space<vmem>>, vector<128x128xf32>
    %cst_16 = arith.constant dense<0.000000e+00> : vector<1x128xf32>
    %33 = tpu.matmul %31, %32, %cst_16 {dimension_numbers = #tpu.dot_dimension_numbers<[1], [0], [0], [1], [0, 0, 1, 1], [], []>} : vector<1x128xf32>, vector<128x128xf32>, vector<1x128xf32> -> vector<1x128xf32>
    %cst_17 = arith.constant 4.096000e+03 : f32
    %34 = vector.broadcast %cst_17 : f32 to vector<1x128xf32>
    %35 = arith.divf %33, %34 : vector<1x128xf32>
    %36 = vector.broadcast %35 : vector<1x128xf32> to vector<256x128xf32>
    %37 = arith.subf %29, %36 : vector<256x128xf32>
    %38 = arith.mulf %37, %37 : vector<256x128xf32>
    %cst_18 = arith.constant dense<0.000000e+00> : vector<128xf32>
    %39 = vector.multi_reduction <add>, %38, %cst_18 [0] : vector<256x128xf32> to vector<128xf32>
    %40 = vector.shape_cast %39 : vector<128xf32> to vector<1x128xf32>
    %c0_19 = arith.constant 0 : index
    %c0_20 = arith.constant 0 : index
    %41 = vector.load %arg4[%c0_19, %c0_20] : memref<128x128xf32, #tpu.memory_space<vmem>>, vector<128x128xf32>
    %cst_21 = arith.constant dense<0.000000e+00> : vector<1x128xf32>
    %42 = tpu.matmul %40, %41, %cst_21 {dimension_numbers = #tpu.dot_dimension_numbers<[1], [0], [0], [1], [0, 0, 1, 1], [], []>} : vector<1x128xf32>, vector<128x128xf32>, vector<1x128xf32> -> vector<1x128xf32>
    %cst_22 = arith.constant 4.096000e+03 : f32
    %43 = vector.broadcast %cst_22 : f32 to vector<1x128xf32>
    %44 = arith.divf %42, %43 : vector<1x128xf32>
    %cst_23 = arith.constant 9.99999974E-6 : f32
    %45 = vector.broadcast %cst_23 : f32 to vector<1x128xf32>
    %46 = arith.addf %44, %45 : vector<1x128xf32>
    %47 = math.rsqrt %46 : vector<1x128xf32>
    %48 = vector.broadcast %47 : vector<1x128xf32> to vector<256x128xf32>
    %49 = arith.mulf %37, %48 : vector<256x128xf32>
    %c0_24 = arith.constant 0 : index
    %c0_25 = arith.constant 0 : index
    %50 = vector.load %arg6[%c0_24, %c0_25] : memref<1x128xf32, #tpu.memory_space<vmem>>, vector<1x128xf32>
    %51 = vector.broadcast %50 : vector<1x128xf32> to vector<256x128xf32>
    %52 = arith.mulf %49, %51 : vector<256x128xf32>
    %c0_26 = arith.constant 0 : index
    %c0_27 = arith.constant 0 : index
    %53 = vector.load %arg7[%c0_26, %c0_27] : memref<1x128xf32, #tpu.memory_space<vmem>>, vector<1x128xf32>
    %54 = vector.broadcast %53 : vector<1x128xf32> to vector<256x128xf32>
    %55 = arith.addf %52, %54 : vector<256x128xf32>
    %c0_28 = arith.constant 0 : index
    %c0_29 = arith.constant 0 : index
    %c0_30 = arith.constant 0 : index
    %56 = vector.load %arg8[%c0_28, %c0_29, %c0_30] : memref<1x1x128xf32, #tpu.memory_space<vmem>>, vector<1x1x128xf32>
    %57 = vector.shape_cast %56 : vector<1x1x128xf32> to vector<1x128xf32>
    %cst_31 = arith.constant 1.000000e+00 : f32
    %58 = vector.broadcast %cst_31 : f32 to vector<1x128xf32>
    %59 = arith.addf %57, %58 : vector<1x128xf32>
    %60 = vector.broadcast %59 : vector<1x128xf32> to vector<256x128xf32>
    %61 = arith.mulf %55, %60 : vector<256x128xf32>
    %c0_32 = arith.constant 0 : index
    %c0_33 = arith.constant 0 : index
    %c0_34 = arith.constant 0 : index
    %62 = vector.load %arg9[%c0_32, %c0_33, %c0_34] : memref<1x1x128xf32, #tpu.memory_space<vmem>>, vector<1x1x128xf32>
    %63 = vector.shape_cast %62 : vector<1x1x128xf32> to vector<1x128xf32>
    %64 = vector.broadcast %63 : vector<1x128xf32> to vector<256x128xf32>
    %65 = arith.addf %61, %64 : vector<256x128xf32>
    %cst_35 = arith.constant 0.000000e+00 : f32
    %66 = vector.broadcast %cst_35 : f32 to vector<256x128xf32>
    %67 = arith.subf %66, %65 : vector<256x128xf32>
    %68 = math.exp %67 : vector<256x128xf32>
    %cst_36 = arith.constant 1.000000e+00 : f32
    %69 = vector.broadcast %cst_36 : f32 to vector<256x128xf32>
    %70 = arith.addf %69, %68 : vector<256x128xf32>
    %71 = tpu.reciprocal %70 {approx = true} : vector<256x128xf32> -> vector<256x128xf32>
    %72 = arith.mulf %65, %71 : vector<256x128xf32>
    %73 = vector.shape_cast %72 : vector<256x128xf32> to vector<1x16x16x128xf32>
    %c0_37 = arith.constant 0 : index
    %c0_38 = arith.constant 0 : index
    %c0_39 = arith.constant 0 : index
    %c0_40 = arith.constant 0 : index
    %74 = vector.load %arg10[%c0_37, %c0_38, %c0_39, %c0_40] : memref<1x16x16x128xf32, #tpu.memory_space<vmem>>, vector<1x16x16x128xf32>
    tpu.vector_store %arg10[%c0_37, %c0_38, %c0_39, %c0_40], %73 {strides = array<i32>} : memref<1x16x16x128xf32, #tpu.memory_space<vmem>>, vector<1x16x16x128xf32>,
    return
  }
  func.func @transform_0(%arg0: i32, %arg1: i32) -> (i32, i32, i32, i32) {
    %c0_i32 = arith.constant 0 : i32
    %c0_i32_0 = arith.constant 0 : i32
    %c0_i32_1 = arith.constant 0 : i32
    %c0_i32_2 = arith.constant 0 : i32
    return %arg0, %c0_i32, %c0_i32_0, %c0_i32_1 : i32, i32, i32, i32
  }
  func.func @transform_1(%arg0: i32, %arg1: i32) -> (i32, i32) {
    %c0_i32 = arith.constant 0 : i32
    %c0_i32_0 = arith.constant 0 : i32
    return %c0_i32, %arg1 : i32, i32
  }
  func.func @transform_2(%arg0: i32, %arg1: i32) -> (i32, i32) {
    %c0_i32 = arith.constant 0 : i32
    %c0_i32_0 = arith.constant 0 : i32
    %c0_i32_1 = arith.constant 0 : i32
    return %c0_i32, %c0_i32_0 : i32, i32
  }
  func.func @transform_3(%arg0: i32, %arg1: i32) -> (i32, i32) {
    %c0_i32 = arith.constant 0 : i32
    %c0_i32_0 = arith.constant 0 : i32
    return %c0_i32, %arg1 : i32, i32
  }
  func.func @transform_4(%arg0: i32, %arg1: i32) -> (i32, i32) {
    %c0_i32 = arith.constant 0 : i32
    %c0_i32_0 = arith.constant 0 : i32
    return %c0_i32, %arg1 : i32, i32
  }
  func.func @transform_5(%arg0: i32, %arg1: i32) -> (i32, i32) {
    %c0_i32 = arith.constant 0 : i32
    %c0_i32_0 = arith.constant 0 : i32
    return %c0_i32, %arg1 : i32, i32
  }
  func.func @transform_6(%arg0: i32, %arg1: i32) -> (i32, i32, i32) {
    %c0_i32 = arith.constant 0 : i32
    %c0_i32_0 = arith.constant 0 : i32
    return %arg0, %c0_i32, %arg1 : i32, i32, i32
  }
  func.func @transform_7(%arg0: i32, %arg1: i32) -> (i32, i32, i32) {
    %c0_i32 = arith.constant 0 : i32
    %c0_i32_0 = arith.constant 0 : i32
    return %arg0, %c0_i32, %arg1 : i32, i32, i32
  }
  func.func @transform_8(%arg0: i32, %arg1: i32) -> (i32, i32, i32, i32) {
    %c0_i32 = arith.constant 0 : i32
    %c0_i32_0 = arith.constant 0 : i32
    %c0_i32_1 = arith.constant 0 : i32
    return %arg0, %c0_i32, %c0_i32_0, %arg1 : i32, i32, i32, i32
  }
}

</mosaic_0001>

<llo_original>
// kernel: block_forward.1
$region0: #{block_forward.1}
  #allocation0 [shape = 'u32[]', space=smem, size = 0x4, offset = 0x4, fixed_abs, tag = 'smem constant byte address 0x4 - core index']
  #allocation1 [shape = 'u32[72,128]{1,0:T(1,128)}', space=vmem, size = 0x9000, scoped, tag = 'internal scratch']
  %s0 = inlined_call_operand.vmem [shape: bf16[2,18,18,128], index: 0, kind: input, shape index: {}]
  %s1 = inlined_call_operand.vmem [shape: bf16[1152,128], index: 1, kind: input, shape index: {}]
  %s2 = inlined_call_operand.vmem [shape: f32[128,128], index: 2, kind: input, shape index: {}]
  %s3 = inlined_call_operand.vmem [shape: f32[1,128], index: 3, kind: input, shape index: {}]
  %s4 = inlined_call_operand.vmem [shape: f32[1,128], index: 4, kind: input, shape index: {}]
  %s5 = inlined_call_operand.vmem [shape: f32[1,128], index: 5, kind: input, shape index: {}]
  %s6 = inlined_call_operand.vmem [shape: f32[2,1,128], index: 6, kind: input, shape index: {}]
  %s7 = inlined_call_operand.vmem [shape: f32[2,1,128], index: 7, kind: input, shape index: {}]
  %s8 = inlined_call_operand.hbm [shape: f32[2,16,16,128], index: 8, kind: output, shape index: {}]
  %s9 = sld [smem:[#allocation0]]
  $region65: #{block_forward.1} parent=0
    _
  %s11 = ssub.s32 1, %s9
  %s12 = scalar_select 0, %s11, %s9
  $region1: #{block_forward.1} parent=0
    #allocation2 [shape = 'u8[262144]{0}', space=vmem, size = 0x40000, scoped, tag = 'output window, operand 0']
    #allocation3 [shape = 's32[2]{0}', space=sflag, size = 0x8, scoped, tag = 'scoped memory for block_forward.1']
    %13 = vsyncpa [#allocation3], 0
    %s14 = scalar_lea.sflag [#allocation3], 1
    %15 = vsyncpa %s14, 0
    loop: start=0, step=1, limit=4
    $region2: #{block_forward.1} parent=1 // loop_pre_header
      _
    $region3: #{block_forward.1} parent=1 // loop_header
      %s17 = sphi 0, %s21
      %p18 = scmp.ge.s32.totalorder %s17, 4
      %s24 = sphi 0, %s36
      %s25 = sphi 0, %s32
      %s26 = sphi 0, %s24
      %s27 = sphi 0, %s25
      %s28 = sphi 0, %s26
      %s29 = sphi 0, %s27
      %s39 = sphi 0, %s41
      %s42 = sphi 0, %s39
      %s43 = sphi 0, %s42
      %s59 = sphi 0, %s43
      %s65 = sphi 0, %s67
      %s68 = sphi 0, %s65
      %s69 = sphi 0, %s68
      %s85 = sphi 0, %s69
      %s89 = sphi 0, %s89
      %s91 = sphi 0, %s89
      %s92 = sphi 0, %s91
      %s106 = sphi 0, %s92
      %s112 = sphi 0, %s114
      %s115 = sphi 0, %s112
      %s116 = sphi 0, %s115
      %s132 = sphi 0, %s116
      %s138 = sphi 0, %s140
      %s141 = sphi 0, %s138
      %s142 = sphi 0, %s141
      %s158 = sphi 0, %s142
      %s164 = sphi 0, %s166
      %s167 = sphi 0, %s164
      %s168 = sphi 0, %s167
      %s184 = sphi 0, %s168
      %s192 = sphi 0, %s194
      %s195 = sphi 0, %s192
      %s196 = sphi 0, %s195
      %s212 = sphi 0, %s196
      %s220 = sphi 0, %s222
      %s223 = sphi 0, %s220
      %s224 = sphi 0, %s223
      %s240 = sphi 0, %s224
      %s248 = sphi 0, %s250
      %s251 = sphi 0, %s248
      %s252 = sphi 0, %s251
      %s268 = sphi 0, %s252
    $region4: #{block_forward.1} parent=1 // loop_header_branch
      %20 = sbr.rel (%p18) target = $region8
    $region5: #{block_forward.1} parent=1 // loop_body
      %s22 = ssub.s32 %s17, 1
      %s23 = ssub.s32 %s17, 2
      %s30 = sadd.s32 1, %s25
      %p31 = scmp.ge.s32.totalorder %s30, 1
      %s32 = scalar_select %p31, 0, %s30
      %s33 = sadd.s32 1, %s24
      %s34 = scalar_select %p31, %s33, %s24
      %p35 = scmp.ge.s32.totalorder %s34, 2
      %s36 = scalar_select %p35, 0, %s34
      %s37 = ssub.s32 %s24, %s36
      %p38 = scmp.eq.s32.totalorder %s37, 0
      %s40 = sadd.s32 %s39, 1
      %s41 = scalar_select %p38, %s39, %s40
      %p44 = pneg %p38
      %p45 = scmp.eq.s32.totalorder %s17, 1
      %p46 = por %p44, %p45
      %p47 = scmp.ne.s32.totalorder %s39, %s42
      %p48 = scmp.eq.s32.totalorder %s17, 0
      %p49 = por %p47, %p48
      %p50 = scmp.ne.s32.totalorder %s39, %s42
      %p51 = scmp.eq.s32.totalorder %s22, 1
      %p52 = por %p50, %p51
      %p53 = scmp.ne.s32.totalorder %s42, %s43
      %p54 = scmp.eq.s32.totalorder %s22, 0
      %p55 = por %p53, %p54
      %p56 = scmp.ne.s32.totalorder %s42, %s43
      %p57 = scmp.eq.s32.totalorder %s23, 1
      %p58 = por %p56, %p57
      %p60 = scmp.ne.s32.totalorder %s43, %s59
      %p61 = scmp.eq.s32.totalorder %s23, 0
      %p62 = por %p60, %p61
      %s63 = ssub.s32 %s25, %s32
      %p64 = scmp.eq.s32.totalorder %s63, 0
      %s66 = sadd.s32 %s65, 1
      %s67 = scalar_select %p64, %s65, %s66
      %p70 = pneg %p64
      %p71 = scmp.eq.s32.totalorder %s17, 1
      %p72 = por %p70, %p71
      %p73 = scmp.ne.s32.totalorder %s65, %s68
      %p74 = scmp.eq.s32.totalorder %s17, 0
      %p75 = por %p73, %p74
      %p76 = scmp.ne.s32.totalorder %s65, %s68
      %p77 = scmp.eq.s32.totalorder %s22, 1
      %p78 = por %p76, %p77
      %p79 = scmp.ne.s32.totalorder %s68, %s69
      %p80 = scmp.eq.s32.totalorder %s22, 0
      %p81 = por %p79, %p80
      %p82 = scmp.ne.s32.totalorder %s68, %s69
      %p83 = scmp.eq.s32.totalorder %s23, 1
      %p84 = por %p82, %p83
      %p86 = scmp.ne.s32.totalorder %s69, %s85
      %p87 = scmp.eq.s32.totalorder %s23, 0
      %p88 = por %p86, %p87
      %s90 = sadd.s32 %s89, 1
      %p93 = scmp.eq.s32.totalorder %s17, 1
      %p94 = scmp.ne.s32.totalorder %s89, %s91
      %p95 = scmp.eq.s32.totalorder %s17, 0
      %p96 = por %p94, %p95
      %p97 = scmp.ne.s32.totalorder %s89, %s91
      %p98 = scmp.eq.s32.totalorder %s22, 1
      %p99 = por %p97, %p98
      %p100 = scmp.ne.s32.totalorder %s91, %s92
      %p101 = scmp.eq.s32.totalorder %s22, 0
      %p102 = por %p100, %p101
      %p103 = scmp.ne.s32.totalorder %s91, %s92
      %p104 = scmp.eq.s32.totalorder %s23, 1
      %p105 = por %p103, %p104
      %p107 = scmp.ne.s32.totalorder %s92, %s106
      %p108 = scmp.eq.s32.totalorder %s23, 0
      %p109 = por %p107, %p108
      %s110 = ssub.s32 %s25, %s32
      %p111 = scmp.eq.s32.totalorder %s110, 0
      %s113 = sadd.s32 %s112, 1
      %s114 = scalar_select %p111, %s112, %s113
      %p117 = pneg %p111
      %p118 = scmp.eq.s32.totalorder %s17, 1
      %p119 = por %p117, %p118
      %p120 = scmp.ne.s32.totalorder %s112, %s115
      %p121 = scmp.eq.s32.totalorder %s17, 0
      %p122 = por %p120, %p121
      %p123 = scmp.ne.s32.totalorder %s112, %s115
      %p124 = scmp.eq.s32.totalorder %s22, 1
      %p125 = por %p123, %p124
      %p126 = scmp.ne.s32.totalorder %s115, %s116
      %p127 = scmp.eq.s32.totalorder %s22, 0
      %p128 = por %p126, %p127
      %p129 = scmp.ne.s32.totalorder %s115, %s116
      %p130 = scmp.eq.s32.totalorder %s23, 1
      %p131 = por %p129, %p130
      %p133 = scmp.ne.s32.totalorder %s116, %s132
      %p134 = scmp.eq.s32.totalorder %s23, 0
      %p135 = por %p133, %p134
      %s136 = ssub.s32 %s25, %s32
      %p137 = scmp.eq.s32.totalorder %s136, 0
      %s139 = sadd.s32 %s138, 1
      %s140 = scalar_select %p137, %s138, %s139
      %p143 = pneg %p137
      %p144 = scmp.eq.s32.totalorder %s17, 1
      %p145 = por %p143, %p144
      %p146 = scmp.ne.s32.totalorder %s138, %s141
      %p147 = scmp.eq.s32.totalorder %s17, 0
      %p148 = por %p146, %p147
      %p149 = scmp.ne.s32.totalorder %s138, %s141
      %p150 = scmp.eq.s32.totalorder %s22, 1
      %p151 = por %p149, %p150
      %p152 = scmp.ne.s32.totalorder %s141, %s142
      %p153 = scmp.eq.s32.totalorder %s22, 0
      %p154 = por %p152, %p153
      %p155 = scmp.ne.s32.totalorder %s141, %s142
      %p156 = scmp.eq.s32.totalorder %s23, 1
      %p157 = por %p155, %p156
      %p159 = scmp.ne.s32.totalorder %s142, %s158
      %p160 = scmp.eq.s32.totalorder %s23, 0
      %p161 = por %p159, %p160
      %s162 = ssub.s32 %s25, %s32
      %p163 = scmp.eq.s32.totalorder %s162, 0
      %s165 = sadd.s32 %s164, 1
      %s166 = scalar_select %p163, %s164, %s165
      %p169 = pneg %p163
      %p170 = scmp.eq.s32.totalorder %s17, 1
      %p171 = por %p169, %p170
      %p172 = scmp.ne.s32.totalorder %s164, %s167
      %p173 = scmp.eq.s32.totalorder %s17, 0
      %p174 = por %p172, %p173
      %p175 = scmp.ne.s32.totalorder %s164, %s167
      %p176 = scmp.eq.s32.totalorder %s22, 1
      %p177 = por %p175, %p176
      %p178 = scmp.ne.s32.totalorder %s167, %s168
      %p179 = scmp.eq.s32.totalorder %s22, 0
      %p180 = por %p178, %p179
      %p181 = scmp.ne.s32.totalorder %s167, %s168
      %p182 = scmp.eq.s32.totalorder %s23, 1
      %p183 = por %p181, %p182
      %p185 = scmp.ne.s32.totalorder %s168, %s184
      %p186 = scmp.eq.s32.totalorder %s23, 0
      %p187 = por %p185, %p186
      %s188 = ssub.s32 %s24, %s36
      %s189 = ssub.s32 %s25, %s32
      %s190 = sor.u32 %s188, %s189
      %p191 = scmp.eq.s32.totalorder %s190, 0
      %s193 = sadd.s32 %s192, 1
      %s194 = scalar_select %p191, %s192, %s193
      %p197 = pneg %p191
      %p198 = scmp.eq.s32.totalorder %s17, 1
      %p199 = por %p197, %p198
      %p200 = scmp.ne.s32.totalorder %s192, %s195
      %p201 = scmp.eq.s32.totalorder %s17, 0
      %p202 = por %p200, %p201
      %p203 = scmp.ne.s32.totalorder %s192, %s195
      %p204 = scmp.eq.s32.totalorder %s22, 1
      %p205 = por %p203, %p204
      %p206 = scmp.ne.s32.totalorder %s195, %s196
      %p207 = scmp.eq.s32.totalorder %s22, 0
      %p208 = por %p206, %p207
      %p209 = scmp.ne.s32.totalorder %s195, %s196
      %p210 = scmp.eq.s32.totalorder %s23, 1
      %p211 = por %p209, %p210
      %p213 = scmp.ne.s32.totalorder %s196, %s212
      %p214 = scmp.eq.s32.totalorder %s23, 0
      %p215 = por %p213, %p214
      %s216 = ssub.s32 %s24, %s36
      %s217 = ssub.s32 %s25, %s32
      %s218 = sor.u32 %s216, %s217
      %p219 = scmp.eq.s32.totalorder %s218, 0
      %s221 = sadd.s32 %s220, 1
      %s222 = scalar_select %p219, %s220, %s221
      %p225 = pneg %p219
      %p226 = scmp.eq.s32.totalorder %s17, 1
      %p227 = por %p225, %p226
      %p228 = scmp.ne.s32.totalorder %s220, %s223
      %p229 = scmp.eq.s32.totalorder %s17, 0
      %p230 = por %p228, %p229
      %p231 = scmp.ne.s32.totalorder %s220, %s223
      %p232 = scmp.eq.s32.totalorder %s22, 1
      %p233 = por %p231, %p232
      %p234 = scmp.ne.s32.totalorder %s223, %s224
      %p235 = scmp.eq.s32.totalorder %s22, 0
      %p236 = por %p234, %p235
      %p237 = scmp.ne.s32.totalorder %s223, %s224
      %p238 = scmp.eq.s32.totalorder %s23, 1
      %p239 = por %p237, %p238
      %p241 = scmp.ne.s32.totalorder %s224, %s240
      %p242 = scmp.eq.s32.totalorder %s23, 0
      %p243 = por %p241, %p242
      %s244 = ssub.s32 %s24, %s36
      %s245 = ssub.s32 %s25, %s32
      %s246 = sor.u32 %s244, %s245
      %p247 = scmp.eq.s32.totalorder %s246, 0
      %s249 = sadd.s32 %s248, 1
      %s250 = scalar_select %p247, %s248, %s249
      %p253 = pneg %p247
      %p254 = scmp.eq.s32.totalorder %s17, 1
      %p255 = por %p253, %p254
      %p256 = scmp.ne.s32.totalorder %s248, %s251
      %p257 = scmp.eq.s32.totalorder %s17, 0
      %p258 = por %p256, %p257
      %p259 = scmp.ne.s32.totalorder %s248, %s251
      %p260 = scmp.eq.s32.totalorder %s22, 1
      %p261 = por %p259, %p260
      %p262 = scmp.ne.s32.totalorder %s251, %s252
      %p263 = scmp.eq.s32.totalorder %s22, 0
      %p264 = por %p262, %p263
      %p265 = scmp.ne.s32.totalorder %s251, %s252
      %p266 = scmp.eq.s32.totalorder %s23, 1
      %p267 = por %p265, %p266
      %p269 = scmp.ne.s32.totalorder %s252, %s268
      %p270 = scmp.eq.s32.totalorder %s23, 0
      %p271 = por %p269, %p270
      %p272 = scmp.le.s32.totalorder 1, %s17
      %p273 = scmp.lt.s32.totalorder %s17, 3
      %p274 = pnand %p272, %p273
      %p275 = pneg %p274
      // Predicated region
      $region9: #{block_forward.1} parent=5 // pred_check
        _
      $region10: #{block_forward.1} parent=5 // pred_check_branch
        %277 = sbr.rel (%p274) target = $region12
      $region11: #{block_forward.1} parent=5 // pred_region
        %s278 = ssub.s32 %s17, 1
        // Predicated region
        $region13: #{block_forward.1} parent=11 // pred_check
          %p279 = pneg %p81
        $region14: #{block_forward.1} parent=11 // pred_check_branch
          %281 = sbr.rel (%p279) target = $region16
        $region15: #{block_forward.1} parent=11 // pred_region
          %p282 = scmp.lt.s32.totalorder %s27, 0
          %s283 = scalar_select %p282, %s27, 0
          %s284 = smul.addr %s283, 4
          %s285 = scalar_lea.vmem %s1, %s284
        $region16: #{block_forward.1} parent=11 // pred_fallthru
          _
        // Predicated region
        $region17: #{block_forward.1} parent=11 // pred_check
          %p286 = pneg %p102
        $region18: #{block_forward.1} parent=11 // pred_check_branch
          %288 = sbr.rel (%p286) target = $region20
        $region19: #{block_forward.1} parent=11 // pred_region
          _
        $region20: #{block_forward.1} parent=11 // pred_fallthru
          _
        // Predicated region
        $region21: #{block_forward.1} parent=11 // pred_check
          %p289 = pneg %p128
        $region22: #{block_forward.1} parent=11 // pred_check_branch
          %291 = sbr.rel (%p289) target = $region24
        $region23: #{block_forward.1} parent=11 // pred_region
          %p292 = scmp.lt.s32.totalorder %s27, 0
          %s293 = scalar_select %p292, %s27, 0
          %s294 = scalar_lea.vmem %s3, %s293
        $region24: #{block_forward.1} parent=11 // pred_fallthru
          _
        // Predicated region
        $region25: #{block_forward.1} parent=11 // pred_check
          %p295 = pneg %p154
        $region26: #{block_forward.1} parent=11 // pred_check_branch
          %297 = sbr.rel (%p295) target = $region28
        $region27: #{block_forward.1} parent=11 // pred_region
          %p298 = scmp.lt.s32.totalorder %s27, 0
          %s299 = scalar_select %p298, %s27, 0
          %s300 = scalar_lea.vmem %s4, %s299
        $region28: #{block_forward.1} parent=11 // pred_fallthru
          _
        // Predicated region
        $region29: #{block_forward.1} parent=11 // pred_check
          %p301 = pneg %p180
        $region30: #{block_forward.1} parent=11 // pred_check_branch
          %303 = sbr.rel (%p301) target = $region32
        $region31: #{block_forward.1} parent=11 // pred_region
          %p304 = scmp.lt.s32.totalorder %s27, 0
          %s305 = scalar_select %p304, %s27, 0
          %s306 = scalar_lea.vmem %s5, %s305
        $region32: #{block_forward.1} parent=11 // pred_fallthru
          _
      $region12: #{block_forward.1} parent=5 // pred_fallthru
        _
      %p307 = scmp.lt.s32.totalorder %s17, 2
      // Predicated region
      $region33: #{block_forward.1} parent=5 // pred_check
        %p308 = pneg %p307
      $region34: #{block_forward.1} parent=5 // pred_check_branch
        %310 = sbr.rel (%p308) target = $region36
      $region35: #{block_forward.1} parent=5 // pred_region
        // Predicated region
        $region37: #{block_forward.1} parent=35 // pred_check
          %p311 = pneg %p49
        $region38: #{block_forward.1} parent=35 // pred_check_branch
          %313 = sbr.rel (%p311) target = $region40
        $region39: #{block_forward.1} parent=35 // pred_region
          %p314 = scmp.lt.s32.totalorder %s24, 1
          %s315 = scalar_select %p314, %s24, 1
          %s316 = smul.addr %s315, 54
          %s317 = smul.addr %s316, 4
          %s318 = scalar_lea.vmem %s0, %s317
        $region40: #{block_forward.1} parent=35 // pred_fallthru
          _
        // Predicated region
        $region41: #{block_forward.1} parent=35 // pred_check
          %p319 = pneg %p202
        $region42: #{block_forward.1} parent=35 // pred_check_branch
          %321 = sbr.rel (%p319) target = $region44
        $region43: #{block_forward.1} parent=35 // pred_region
          %p322 = scmp.lt.s32.totalorder %s24, 1
          %s323 = scalar_select %p322, %s24, 1
          %p324 = scmp.lt.s32.totalorder %s25, 0
          %s325 = scalar_select %p324, %s25, 0
          %s326 = sadd.s32 %s325, %s323
          %s327 = scalar_lea.vmem %s6, %s326
        $region44: #{block_forward.1} parent=35 // pred_fallthru
          _
        // Predicated region
        $region45: #{block_forward.1} parent=35 // pred_check
          %p328 = pneg %p230
        $region46: #{block_forward.1} parent=35 // pred_check_branch
          %330 = sbr.rel (%p328) target = $region48
        $region47: #{block_forward.1} parent=35 // pred_region
          %p331 = scmp.lt.s32.totalorder %s24, 1
          %s332 = scalar_select %p331, %s24, 1
          %p333 = scmp.lt.s32.totalorder %s25, 0
          %s334 = scalar_select %p333, %s25, 0
          %s335 = sadd.s32 %s334, %s332
          %s336 = scalar_lea.vmem %s7, %s335
        $region48: #{block_forward.1} parent=35 // pred_fallthru
          _
      $region36: #{block_forward.1} parent=5 // pred_fallthru
        _
      %p337 = scmp.le.s32.totalorder 1, %s17
      %p338 = scmp.lt.s32.totalorder %s17, 3
      %p339 = pnand %p337, %p338
      %p340 = pneg %p339
      // Predicated region
      $region49: #{block_forward.1} parent=5 // pred_check
        _
      $region50: #{block_forward.1} parent=5 // pred_check_branch
        %342 = sbr.rel (%p339) target = $region52
      $region51: #{block_forward.1} parent=5 // pred_region
        %s343 = ssub.s32 %s17, 1
        %p344 = scmp.lt.s32.totalorder %s26, 1
        %s345 = scalar_select %p344, %s26, 1
        %s346 = smul.addr %s345, 54
        %s347 = smul.addr %s346, 4
        %s348 = scalar_lea.vmem %s0, %s347
        %p349 = pneg %p55
        %p350 = pneg %p52
        %p351 = scmp.lt.s32.totalorder %s27, 0
        %s352 = scalar_select %p351, %s27, 0
        %s353 = smul.addr %s352, 4
        %s354 = scalar_lea.vmem %s1, %s353
        %p355 = pneg %p81
        %p356 = pneg %p78
        %p357 = pneg %p102
        %p358 = pneg %p99
        %p359 = scmp.lt.s32.totalorder %s27, 0
        %s360 = scalar_select %p359, %s27, 0
        %s361 = scalar_lea.vmem %s3, %s360
        %p362 = pneg %p128
        %p363 = pneg %p125
        %p364 = scmp.lt.s32.totalorder %s27, 0
        %s365 = scalar_select %p364, %s27, 0
        %s366 = scalar_lea.vmem %s4, %s365
        %p367 = pneg %p154
        %p368 = pneg %p151
        %p369 = scmp.lt.s32.totalorder %s27, 0
        %s370 = scalar_select %p369, %s27, 0
        %s371 = scalar_lea.vmem %s5, %s370
        %p372 = pneg %p180
        %p373 = pneg %p177
        %p374 = scmp.lt.s32.totalorder %s26, 1
        %s375 = scalar_select %p374, %s26, 1
        %p376 = scmp.lt.s32.totalorder %s27, 0
        %s377 = scalar_select %p376, %s27, 0
        %s378 = sadd.s32 %s377, %s375
        %s379 = scalar_lea.vmem %s6, %s378
        %p380 = pneg %p208
        %p381 = pneg %p205
        %p382 = scmp.lt.s32.totalorder %s26, 1
        %s383 = scalar_select %p382, %s26, 1
        %p384 = scmp.lt.s32.totalorder %s27, 0
        %s385 = scalar_select %p384, %s27, 0
        %s386 = sadd.s32 %s385, %s383
        %s387 = scalar_lea.vmem %s7, %s386
        %p388 = pneg %p236
        %p389 = pneg %p233
        %p390 = pneg %p264
        %p391 = pneg %p261
        %s392 = sand.u32 %s251, 1
        %s393 = scalar_lea.sflag [#allocation3], %s392
        %s394 = sand.u32 %s251, 1
        %s395 = smul.addr %s394, 256
        %s396 = scalar_lea.vmem [#allocation2], %s395
        %p397 = scmp.lt.s32.totalorder %s26, 1
        %s398 = scalar_select %p397, %s26, 1
        %s399 = smul.addr %s398, 54
        %s400 = smul.addr %s399, 4
        %s401 = scalar_lea.vmem %s0, %s400
        %p402 = scmp.lt.s32.totalorder %s27, 0
        %s403 = scalar_select %p402, %s27, 0
        %s404 = smul.addr %s403, 4
        %s405 = scalar_lea.vmem %s1, %s404
        %p406 = scmp.lt.s32.totalorder %s27, 0
        %s407 = scalar_select %p406, %s27, 0
        %s408 = scalar_lea.vmem %s3, %s407
        %p409 = scmp.lt.s32.totalorder %s27, 0
        %s410 = scalar_select %p409, %s27, 0
        %s411 = scalar_lea.vmem %s4, %s410
        %p412 = scmp.lt.s32.totalorder %s27, 0
        %s413 = scalar_select %p412, %s27, 0
        %s414 = scalar_lea.vmem %s5, %s413
        %p415 = scmp.lt.s32.totalorder %s26, 1
        %s416 = scalar_select %p415, %s26, 1
        %p417 = scmp.lt.s32.totalorder %s27, 0
        %s418 = scalar_select %p417, %s27, 0
        %s419 = sadd.s32 %s418, %s416
        %s420 = scalar_lea.vmem %s6, %s419
        %p421 = scmp.lt.s32.totalorder %s26, 1
        %s422 = scalar_select %p421, %s26, 1
        %p423 = scmp.lt.s32.totalorder %s27, 0
        %s424 = scalar_select %p423, %s27, 0
        %s425 = sadd.s32 %s424, %s422
        %s426 = scalar_lea.vmem %s7, %s425
        %v427 = vld [vmem:[%s401] sm:$0xf]
        %v428 = vld [vmem:[%s401 + $0x4] sm:$0xf]
        %v429 = vld [vmem:[%s401 + $0xc] sm:$0xf]
        %v430 = vld [vmem:[%s401 + $0x10] sm:$0xf]
        %v431 = vld [vmem:[%s401 + $0x18] sm:$0xf]
        %v432 = vld [vmem:[%s401 + $0x1c] sm:$0xf]
        %v433 = vld [vmem:[%s401 + $0x24] sm:$0xf]
        %v434 = vld [vmem:[%s401 + $0x28] sm:$0xf]
        %v435 = vld [vmem:[%s401 + $0x30] sm:$0xf]
        %v436 = vld [vmem:[%s401 + $0x34] sm:$0xf]
        %v437 = vld [vmem:[%s401 + $0x3c] sm:$0xf]
        %v438 = vld [vmem:[%s401 + $0x40] sm:$0xf]
        %v439 = vld [vmem:[%s401 + $0x48] sm:$0xf]
        %v440 = vld [vmem:[%s401 + $0x4c] sm:$0xf]
        %v441 = vld [vmem:[%s401 + $0x54] sm:$0xf]
        %v442 = vld [vmem:[%s401 + $0x58] sm:$0xf]
        %v443 = vld [vmem:[%s401 + $0x60] sm:$0xf]
        %v444 = vld [vmem:[%s401 + $0x64] sm:$0xf]
        %v445 = vld [vmem:[%s401 + $0x6c] sm:$0xf]
        %v446 = vld [vmem:[%s401 + $0x70] sm:$0xf]
        %v447 = vld [vmem:[%s401 + $0x78] sm:$0xf]
        %v448 = vld [vmem:[%s401 + $0x7c] sm:$0xf]
        %v449 = vld [vmem:[%s401 + $0x84] sm:$0xf]
        %v450 = vld [vmem:[%s401 + $0x88] sm:$0xf]
        %v451 = vld [vmem:[%s401 + $0x90] sm:$0xf]
        %v452 = vld [vmem:[%s401 + $0x94] sm:$0xf]
        %v453 = vld [vmem:[%s401 + $0x9c] sm:$0xf]
        %v454 = vld [vmem:[%s401 + $0xa0] sm:$0xf]
        %v455 = vld [vmem:[%s401 + $0xa8] sm:$0xf]
        %v456 = vld [vmem:[%s401 + $0xac] sm:$0xf]
        %v457 = vld [vmem:[%s401 + $0xb4] sm:$0xf]
        %v458 = vld [vmem:[%s401 + $0xb8] sm:$0xf]
        %v459 = vld [vmem:[%s401 + $0xc0] sm:$0xf]
        %v460 = vld [vmem:[%s401 + $0xc4] sm:$0xf]
        %v461 = vld [vmem:[%s401 + $0xcc] sm:$0xf]
        %v462 = vld [vmem:[%s401 + $0xd0] sm:$0xf]
        %v463 = vld [vmem:[%s401 + $0x8] sm:$0x1]
        %v464 = vld [vmem:[%s401 + $0x14] sm:$0x1]
        %v465 = vld [vmem:[%s401 + $0x20] sm:$0x1]
        %v466 = vld [vmem:[%s401 + $0x2c] sm:$0x1]
        %v467 = vld [vmem:[%s401 + $0x38] sm:$0x1]
        %v468 = vld [vmem:[%s401 + $0x44] sm:$0x1]
        %v469 = vld [vmem:[%s401 + $0x50] sm:$0x1]
        %v470 = vld [vmem:[%s401 + $0x5c] sm:$0x1]
        %v471 = vld [vmem:[%s401 + $0x68] sm:$0x1]
        %v472 = vld [vmem:[%s401 + $0x74] sm:$0x1]
        %v473 = vld [vmem:[%s401 + $0x80] sm:$0x1]
        %v474 = vld [vmem:[%s401 + $0x8c] sm:$0x1]
        %v475 = vld [vmem:[%s401 + $0x98] sm:$0x1]
        %v476 = vld [vmem:[%s401 + $0xa4] sm:$0x1]
        %v477 = vld [vmem:[%s401 + $0xb0] sm:$0x1]
        %v478 = vld [vmem:[%s401 + $0xbc] sm:$0x1]
        %v479 = vld [vmem:[%s401 + $0xc8] sm:$0x1]
        %v480 = vld [vmem:[%s401 + $0xd4] sm:$0x1]
        %v481 = vld [vmem:[%s401] sm:$0xe]
        %v482 = vld [vmem:[%s401 + $0xc] sm:$0xe]
        %v483 = vld [vmem:[%s401 + $0x18] sm:$0xe]
        %v484 = vld [vmem:[%s401 + $0x24] sm:$0xe]
        %v485 = vld [vmem:[%s401 + $0x30] sm:$0xe]
        %v486 = vld [vmem:[%s401 + $0x3c] sm:$0xe]
        %v487 = vld [vmem:[%s401 + $0x48] sm:$0xe]
        %v488 = vld [vmem:[%s401 + $0x54] sm:$0xe]
        %v489 = vld [vmem:[%s401 + $0x60] sm:$0xe]
        %v490 = vld [vmem:[%s401 + $0x6c] sm:$0xe]
        %v491 = vld [vmem:[%s401 + $0x78] sm:$0xe]
        %v492 = vld [vmem:[%s401 + $0x84] sm:$0xe]
        %v493 = vld [vmem:[%s401 + $0x90] sm:$0xe]
        %v494 = vld [vmem:[%s401 + $0x9c] sm:$0xe]
        %v495 = vld [vmem:[%s401 + $0xa8] sm:$0xe]
        %v496 = vld [vmem:[%s401 + $0xb4] sm:$0xe]
        %v497 = vld [vmem:[%s401 + $0xc0] sm:$0xe]
        %v498 = vld [vmem:[%s401 + $0xcc] sm:$0xe]
        %vm499 = vsmask.f32 3328
        %vm500 = vsmask.f32 7440
        %vm501 = vmor %vm499, %vm500
        %v503 = vshrl.u32 %v427, 16
        %v505 = vrot.slane %v503, 4
        %v506 = vshll.u32 %v427, 16
        %v508 = vrot.slane %v506, 5
        %v509 = vor.u32 %v505, %v508
        %v510 = vrot.slane %v509, 4
        %v512 = vshll.u32 %v428, 16
        %v514 = vrot.slane %v512, 5
        %v515 = vsel %vm501, %v510, %v514
        %v516 = vshrl.u32 %v428, 16
        %v518 = vrot.slane %v516, 4
        %v519 = vor.u32 %v518, %v514
        %v520 = vrot.slane %v519, 4
        %v522 = vshll.u32 %v463, 16
        %v524 = vrot.slane %v522, 5
        %v525 = vsel %vm501, %v520, %v524
        %v527 = vshrl.u32 %v429, 16
        %v529 = vrot.slane %v527, 4
        %v530 = vshll.u32 %v429, 16
        %v532 = vrot.slane %v530, 5
        %v533 = vor.u32 %v529, %v532
        %v534 = vrot.slane %v533, 4
        %v536 = vshll.u32 %v430, 16
        %v538 = vrot.slane %v536, 5
        %v539 = vsel %vm501, %v534, %v538
        %v540 = vshrl.u32 %v430, 16
        %v542 = vrot.slane %v540, 4
        %v543 = vor.u32 %v542, %v538
        %v544 = vrot.slane %v543, 4
        %v546 = vshll.u32 %v464, 16
        %v548 = vrot.slane %v546, 5
        %v549 = vsel %vm501, %v544, %v548
        %v551 = vshrl.u32 %v431, 16
        %v553 = vrot.slane %v551, 4
        %v554 = vshll.u32 %v431, 16
        %v556 = vrot.slane %v554, 5
        %v557 = vor.u32 %v553, %v556
        %v558 = vrot.slane %v557, 4
        %v560 = vshll.u32 %v432, 16
        %v562 = vrot.slane %v560, 5
        %v563 = vsel %vm501, %v558, %v562
        %v564 = vshrl.u32 %v432, 16
        %v566 = vrot.slane %v564, 4
        %v567 = vor.u32 %v566, %v562
        %v568 = vrot.slane %v567, 4
        %v570 = vshll.u32 %v465, 16
        %v572 = vrot.slane %v570, 5
        %v573 = vsel %vm501, %v568, %v572
        %v575 = vshrl.u32 %v433, 16
        %v577 = vrot.slane %v575, 4
        %v578 = vshll.u32 %v433, 16
        %v580 = vrot.slane %v578, 5
        %v581 = vor.u32 %v577, %v580
        %v582 = vrot.slane %v581, 4
        %v584 = vshll.u32 %v434, 16
        %v586 = vrot.slane %v584, 5
        %v587 = vsel %vm501, %v582, %v586
        %v588 = vshrl.u32 %v434, 16
        %v590 = vrot.slane %v588, 4
        %v591 = vor.u32 %v590, %v586
        %v592 = vrot.slane %v591, 4
        %v594 = vshll.u32 %v466, 16
        %v596 = vrot.slane %v594, 5
        %v597 = vsel %vm501, %v592, %v596
        %v599 = vshrl.u32 %v435, 16
        %v601 = vrot.slane %v599, 4
        %v602 = vshll.u32 %v435, 16
        %v604 = vrot.slane %v602, 5
        %v605 = vor.u32 %v601, %v604
        %v606 = vrot.slane %v605, 4
        %v608 = vshll.u32 %v436, 16
        %v610 = vrot.slane %v608, 5
        %v611 = vsel %vm501, %v606, %v610
        %v612 = vshrl.u32 %v436, 16
        %v614 = vrot.slane %v612, 4
        %v615 = vor.u32 %v614, %v610
        %v616 = vrot.slane %v615, 4
        %v618 = vshll.u32 %v467, 16
        %v620 = vrot.slane %v618, 5
        %v621 = vsel %vm501, %v616, %v620
        %v623 = vshrl.u32 %v437, 16
        %v625 = vrot.slane %v623, 4
        %v626 = vshll.u32 %v437, 16
        %v628 = vrot.slane %v626, 5
        %v629 = vor.u32 %v625, %v628
        %v630 = vrot.slane %v629, 4
        %v632 = vshll.u32 %v438, 16
        %v634 = vrot.slane %v632, 5
        %v635 = vsel %vm501, %v630, %v634
        %v636 = vshrl.u32 %v438, 16
        %v638 = vrot.slane %v636, 4
        %v639 = vor.u32 %v638, %v634
        %v640 = vrot.slane %v639, 4
        %v642 = vshll.u32 %v468, 16
        %v644 = vrot.slane %v642, 5
        %v645 = vsel %vm501, %v640, %v644
        %v647 = vshrl.u32 %v439, 16
        %v649 = vrot.slane %v647, 4
        %v650 = vshll.u32 %v439, 16
        %v652 = vrot.slane %v650, 5
        %v653 = vor.u32 %v649, %v652
        %v654 = vrot.slane %v653, 4
        %v656 = vshll.u32 %v440, 16
        %v658 = vrot.slane %v656, 5
        %v659 = vsel %vm501, %v654, %v658
        %v660 = vshrl.u32 %v440, 16
        %v662 = vrot.slane %v660, 4
        %v663 = vor.u32 %v662, %v658
        %v664 = vrot.slane %v663, 4
        %v666 = vshll.u32 %v469, 16
        %v668 = vrot.slane %v666, 5
        %v669 = vsel %vm501, %v664, %v668
        %v671 = vshrl.u32 %v441, 16
        %v673 = vrot.slane %v671, 4
        %v674 = vshll.u32 %v441, 16
        %v676 = vrot.slane %v674, 5
        %v677 = vor.u32 %v673, %v676
        %v678 = vrot.slane %v677, 4
        %v680 = vshll.u32 %v442, 16
        %v682 = vrot.slane %v680, 5
        %v683 = vsel %vm501, %v678, %v682
        %v684 = vshrl.u32 %v442, 16
        %v686 = vrot.slane %v684, 4
        %v687 = vor.u32 %v686, %v682
        %v688 = vrot.slane %v687, 4
        %v690 = vshll.u32 %v470, 16
        %v692 = vrot.slane %v690, 5
        %v693 = vsel %vm501, %v688, %v692
        %v695 = vshrl.u32 %v443, 16
        %v697 = vrot.slane %v695, 4
        %v698 = vshll.u32 %v443, 16
        %v700 = vrot.slane %v698, 5
        %v701 = vor.u32 %v697, %v700
        %v702 = vrot.slane %v701, 4
        %v704 = vshll.u32 %v444, 16
        %v706 = vrot.slane %v704, 5
        %v707 = vsel %vm501, %v702, %v706
        %v708 = vshrl.u32 %v444, 16
        %v710 = vrot.slane %v708, 4
        %v711 = vor.u32 %v710, %v706
        %v712 = vrot.slane %v711, 4
        %v714 = vshll.u32 %v471, 16
        %v716 = vrot.slane %v714, 5
        %v717 = vsel %vm501, %v712, %v716
        %v719 = vshrl.u32 %v445, 16
        %v721 = vrot.slane %v719, 4
        %v722 = vshll.u32 %v445, 16
        %v724 = vrot.slane %v722, 5
        %v725 = vor.u32 %v721, %v724
        %v726 = vrot.slane %v725, 4
        %v728 = vshll.u32 %v446, 16
        %v730 = vrot.slane %v728, 5
        %v731 = vsel %vm501, %v726, %v730
        %v732 = vshrl.u32 %v446, 16
        %v734 = vrot.slane %v732, 4
        %v735 = vor.u32 %v734, %v730
        %v736 = vrot.slane %v735, 4
        %v738 = vshll.u32 %v472, 16
        %v740 = vrot.slane %v738, 5
        %v741 = vsel %vm501, %v736, %v740
        %v743 = vshrl.u32 %v447, 16
        %v745 = vrot.slane %v743, 4
        %v746 = vshll.u32 %v447, 16
        %v748 = vrot.slane %v746, 5
        %v749 = vor.u32 %v745, %v748
        %v750 = vrot.slane %v749, 4
        %v752 = vshll.u32 %v448, 16
        %v754 = vrot.slane %v752, 5
        %v755 = vsel %vm501, %v750, %v754
        %v756 = vshrl.u32 %v448, 16
        %v758 = vrot.slane %v756, 4
        %v759 = vor.u32 %v758, %v754
        %v760 = vrot.slane %v759, 4
        %v762 = vshll.u32 %v473, 16
        %v764 = vrot.slane %v762, 5
        %v765 = vsel %vm501, %v760, %v764
        %v767 = vshrl.u32 %v449, 16
        %v769 = vrot.slane %v767, 4
        %v770 = vshll.u32 %v449, 16
        %v772 = vrot.slane %v770, 5
        %v773 = vor.u32 %v769, %v772
        %v774 = vrot.slane %v773, 4
        %v776 = vshll.u32 %v450, 16
        %v778 = vrot.slane %v776, 5
        %v779 = vsel %vm501, %v774, %v778
        %v780 = vshrl.u32 %v450, 16
        %v782 = vrot.slane %v780, 4
        %v783 = vor.u32 %v782, %v778
        %v784 = vrot.slane %v783, 4
        %v786 = vshll.u32 %v474, 16
        %v788 = vrot.slane %v786, 5
        %v789 = vsel %vm501, %v784, %v788
        %v791 = vshrl.u32 %v451, 16
        %v793 = vrot.slane %v791, 4
        %v794 = vshll.u32 %v451, 16
        %v796 = vrot.slane %v794, 5
        %v797 = vor.u32 %v793, %v796
        %v798 = vrot.slane %v797, 4
        %v800 = vshll.u32 %v452, 16
        %v802 = vrot.slane %v800, 5
        %v803 = vsel %vm501, %v798, %v802
        %v804 = vshrl.u32 %v452, 16
        %v806 = vrot.slane %v804, 4
        %v807 = vor.u32 %v806, %v802
        %v808 = vrot.slane %v807, 4
        %v810 = vshll.u32 %v475, 16
        %v812 = vrot.slane %v810, 5
        %v813 = vsel %vm501, %v808, %v812
        %v815 = vshrl.u32 %v453, 16
        %v817 = vrot.slane %v815, 4
        %v818 = vshll.u32 %v453, 16
        %v820 = vrot.slane %v818, 5
        %v821 = vor.u32 %v817, %v820
        %v822 = vrot.slane %v821, 4
        %v824 = vshll.u32 %v454, 16
        %v826 = vrot.slane %v824, 5
        %v827 = vsel %vm501, %v822, %v826
        %v828 = vshrl.u32 %v454, 16
        %v830 = vrot.slane %v828, 4
        %v831 = vor.u32 %v830, %v826
        %v832 = vrot.slane %v831, 4
        %v834 = vshll.u32 %v476, 16
        %v836 = vrot.slane %v834, 5
        %v837 = vsel %vm501, %v832, %v836
        %v839 = vshrl.u32 %v455, 16
        %v841 = vrot.slane %v839, 4
        %v842 = vshll.u32 %v455, 16
        %v844 = vrot.slane %v842, 5
        %v845 = vor.u32 %v841, %v844
        %v846 = vrot.slane %v845, 4
        %v848 = vshll.u32 %v456, 16
        %v850 = vrot.slane %v848, 5
        %v851 = vsel %vm501, %v846, %v850
        %v852 = vshrl.u32 %v456, 16
        %v854 = vrot.slane %v852, 4
        %v855 = vor.u32 %v854, %v850
        %v856 = vrot.slane %v855, 4
        %v858 = vshll.u32 %v477, 16
        %v860 = vrot.slane %v858, 5
        %v861 = vsel %vm501, %v856, %v860
        %v863 = vshrl.u32 %v457, 16
        %v865 = vrot.slane %v863, 4
        %v866 = vshll.u32 %v457, 16
        %v868 = vrot.slane %v866, 5
        %v869 = vor.u32 %v865, %v868
        %v870 = vrot.slane %v869, 4
        %v872 = vshll.u32 %v458, 16
        %v874 = vrot.slane %v872, 5
        %v875 = vsel %vm501, %v870, %v874
        %v876 = vshrl.u32 %v458, 16
        %v878 = vrot.slane %v876, 4
        %v879 = vor.u32 %v878, %v874
        %v880 = vrot.slane %v879, 4
        %v882 = vshll.u32 %v478, 16
        %v884 = vrot.slane %v882, 5
        %v885 = vsel %vm501, %v880, %v884
        %vm934 = vcmask 1042432
        %vm935 = vcmask 1046532
        %vm936 = vmor %vm934, %vm935
        %v937 = vrot.slane %v481, 5
        %v938 = vrot.slane %v937, 4
        %v939 = vrot.slane %v428, 5
        %v940 = vsel %vm936, %v938, %v939
        %v941 = vrot.slane %v939, 4
        %v942 = vrot.slane %v463, 5
        %v943 = vsel %vm936, %v941, %v942
        %v944 = vrot.slane %v482, 5
        %v945 = vrot.slane %v944, 4
        %v946 = vrot.slane %v430, 5
        %v947 = vsel %vm936, %v945, %v946
        %v948 = vrot.slane %v946, 4
        %v949 = vrot.slane %v464, 5
        %v950 = vsel %vm936, %v948, %v949
        %v951 = vrot.slane %v483, 5
        %v952 = vrot.slane %v951, 4
        %v953 = vrot.slane %v432, 5
        %v954 = vsel %vm936, %v952, %v953
        %v955 = vrot.slane %v953, 4
        %v956 = vrot.slane %v465, 5
        %v957 = vsel %vm936, %v955, %v956
        %v958 = vrot.slane %v484, 5
        %v959 = vrot.slane %v958, 4
        %v960 = vrot.slane %v434, 5
        %v961 = vsel %vm936, %v959, %v960
        %v962 = vrot.slane %v960, 4
        %v963 = vrot.slane %v466, 5
        %v964 = vsel %vm936, %v962, %v963
        %v965 = vrot.slane %v485, 5
        %v966 = vrot.slane %v965, 4
        %v967 = vrot.slane %v436, 5
        %v968 = vsel %vm936, %v966, %v967
        %v969 = vrot.slane %v967, 4
        %v970 = vrot.slane %v467, 5
        %v971 = vsel %vm936, %v969, %v970
        %v972 = vrot.slane %v486, 5
        %v973 = vrot.slane %v972, 4
        %v974 = vrot.slane %v438, 5
        %v975 = vsel %vm936, %v973, %v974
        %v976 = vrot.slane %v974, 4
        %v977 = vrot.slane %v468, 5
        %v978 = vsel %vm936, %v976, %v977
        %v979 = vrot.slane %v487, 5
        %v980 = vrot.slane %v979, 4
        %v981 = vrot.slane %v440, 5
        %v982 = vsel %vm936, %v980, %v981
        %v983 = vrot.slane %v981, 4
        %v984 = vrot.slane %v469, 5
        %v985 = vsel %vm936, %v983, %v984
        %v986 = vrot.slane %v488, 5
        %v987 = vrot.slane %v986, 4
        %v988 = vrot.slane %v442, 5
        %v989 = vsel %vm936, %v987, %v988
        %v990 = vrot.slane %v988, 4
        %v991 = vrot.slane %v470, 5
        %v992 = vsel %vm936, %v990, %v991
        %v993 = vrot.slane %v489, 5
        %v994 = vrot.slane %v993, 4
        %v995 = vrot.slane %v444, 5
        %v996 = vsel %vm936, %v994, %v995
        %v997 = vrot.slane %v995, 4
        %v998 = vrot.slane %v471, 5
        %v999 = vsel %vm936, %v997, %v998
        %v1000 = vrot.slane %v490, 5
        %v1001 = vrot.slane %v1000, 4
        %v1002 = vrot.slane %v446, 5
        %v1003 = vsel %vm936, %v1001, %v1002
        %v1004 = vrot.slane %v1002, 4
        %v1005 = vrot.slane %v472, 5
        %v1006 = vsel %vm936, %v1004, %v1005
        %v1007 = vrot.slane %v491, 5
        %v1008 = vrot.slane %v1007, 4
        %v1009 = vrot.slane %v448, 5
        %v1010 = vsel %vm936, %v1008, %v1009
        %v1011 = vrot.slane %v1009, 4
        %v1012 = vrot.slane %v473, 5
        %v1013 = vsel %vm936, %v1011, %v1012
        %v1014 = vrot.slane %v492, 5
        %v1015 = vrot.slane %v1014, 4
        %v1016 = vrot.slane %v450, 5
        %v1017 = vsel %vm936, %v1015, %v1016
        %v1018 = vrot.slane %v1016, 4
        %v1019 = vrot.slane %v474, 5
        %v1020 = vsel %vm936, %v1018, %v1019
        %v1021 = vrot.slane %v493, 5
        %v1022 = vrot.slane %v1021, 4
        %v1023 = vrot.slane %v452, 5
        %v1024 = vsel %vm936, %v1022, %v1023
        %v1025 = vrot.slane %v1023, 4
        %v1026 = vrot.slane %v475, 5
        %v1027 = vsel %vm936, %v1025, %v1026
        %v1028 = vrot.slane %v494, 5
        %v1029 = vrot.slane %v1028, 4
        %v1030 = vrot.slane %v454, 5
        %v1031 = vsel %vm936, %v1029, %v1030
        %v1032 = vrot.slane %v1030, 4
        %v1033 = vrot.slane %v476, 5
        %v1034 = vsel %vm936, %v1032, %v1033
        %v1035 = vrot.slane %v495, 5
        %v1036 = vrot.slane %v1035, 4
        %v1037 = vrot.slane %v456, 5
        %v1038 = vsel %vm936, %v1036, %v1037
        %v1039 = vrot.slane %v1037, 4
        %v1040 = vrot.slane %v477, 5
        %v1041 = vsel %vm936, %v1039, %v1040
        %v1042 = vrot.slane %v496, 5
        %v1043 = vrot.slane %v1042, 4
        %v1044 = vrot.slane %v458, 5
        %v1045 = vsel %vm936, %v1043, %v1044
        %v1046 = vrot.slane %v1044, 4
        %v1047 = vrot.slane %v478, 5
        %v1048 = vsel %vm936, %v1046, %v1047
        %v1050 = vshrl.u32 %v459, 16
        %v1052 = vrot.slane %v1050, 4
        %v1053 = vshll.u32 %v459, 16
        %v1055 = vrot.slane %v1053, 5
        %v1056 = vor.u32 %v1052, %v1055
        %v1057 = vrot.slane %v1056, 4
        %v1059 = vshll.u32 %v460, 16
        %v1061 = vrot.slane %v1059, 5
        %v1062 = vsel %vm501, %v1057, %v1061
        %v1063 = vshrl.u32 %v460, 16
        %v1065 = vrot.slane %v1063, 4
        %v1066 = vor.u32 %v1065, %v1061
        %v1067 = vrot.slane %v1066, 4
        %v1069 = vshll.u32 %v479, 16
        %v1071 = vrot.slane %v1069, 5
        %v1072 = vsel %vm501, %v1067, %v1071
        %v1076 = vrot.slane %v497, 5
        %v1077 = vrot.slane %v1076, 4
        %v1078 = vrot.slane %v460, 5
        %v1079 = vsel %vm936, %v1077, %v1078
        %v1080 = vrot.slane %v1078, 4
        %v1081 = vrot.slane %v479, 5
        %v1082 = vsel %vm936, %v1080, %v1081
        %v1084 = vshrl.u32 %v461, 16
        %v1086 = vrot.slane %v1084, 4
        %v1087 = vshll.u32 %v461, 16
        %v1089 = vrot.slane %v1087, 5
        %v1090 = vor.u32 %v1086, %v1089
        %v1091 = vrot.slane %v1090, 4
        %v1093 = vshll.u32 %v462, 16
        %v1095 = vrot.slane %v1093, 5
        %v1096 = vsel %vm501, %v1091, %v1095
        %v1097 = vshrl.u32 %v462, 16
        %v1099 = vrot.slane %v1097, 4
        %v1100 = vor.u32 %v1099, %v1095
        %v1101 = vrot.slane %v1100, 4
        %v1103 = vshll.u32 %v480, 16
        %v1105 = vrot.slane %v1103, 5
        %v1106 = vsel %vm501, %v1101, %v1105
        %v1110 = vrot.slane %v498, 5
        %v1111 = vrot.slane %v1110, 4
        %v1112 = vrot.slane %v462, 5
        %v1113 = vsel %vm936, %v1111, %v1112
        %v1114 = vrot.slane %v1112, 4
        %v1115 = vrot.slane %v480, 5
        %v1116 = vsel %vm936, %v1114, %v1115
        %v1133 = vunpack.c.l.b16 %v427
        %v1134 = vunpack.c.l.b16 %v428
        %v1135 = vunpack.c.l.b16 %v429
        %v1136 = vunpack.c.l.b16 %v430
        %v1137 = vunpack.c.l.b16 %v431
        %v1138 = vunpack.c.l.b16 %v432
        %v1139 = vunpack.c.l.b16 %v433
        %v1140 = vunpack.c.l.b16 %v434
        %v1141 = vunpack.c.l.b16 %v435
        %v1142 = vunpack.c.l.b16 %v436
        %v1143 = vunpack.c.l.b16 %v437
        %v1144 = vunpack.c.l.b16 %v438
        %v1145 = vunpack.c.l.b16 %v439
        %v1146 = vunpack.c.l.b16 %v440
        %v1147 = vunpack.c.l.b16 %v441
        %v1148 = vunpack.c.l.b16 %v442
        %v1149 = vunpack.c.l.b16 %v443
        %v1150 = vunpack.c.l.b16 %v444
        %v1151 = vunpack.c.l.b16 %v445
        %v1152 = vunpack.c.l.b16 %v446
        %v1153 = vunpack.c.l.b16 %v447
        %v1154 = vunpack.c.l.b16 %v448
        %v1155 = vunpack.c.l.b16 %v449
        %v1156 = vunpack.c.l.b16 %v450
        %v1157 = vunpack.c.l.b16 %v451
        %v1158 = vunpack.c.l.b16 %v452
        %v1159 = vunpack.c.l.b16 %v453
        %v1160 = vunpack.c.l.b16 %v454
        %v1161 = vunpack.c.l.b16 %v455
        %v1162 = vunpack.c.l.b16 %v456
        %v1163 = vunpack.c.l.b16 %v457
        %v1164 = vunpack.c.l.b16 %v458
        %v1165 = vpack.c.b16 %v1134, %v1133
        %v1166 = vpack.c.b16 %v1136, %v1135
        %v1167 = vpack.c.b16 %v1138, %v1137
        %v1168 = vpack.c.b16 %v1140, %v1139
        %v1169 = vpack.c.b16 %v1142, %v1141
        %v1170 = vpack.c.b16 %v1144, %v1143
        %v1171 = vpack.c.b16 %v1146, %v1145
        %v1172 = vpack.c.b16 %v1148, %v1147
        %v1173 = vpack.c.b16 %v1150, %v1149
        %v1174 = vpack.c.b16 %v1152, %v1151
        %v1175 = vpack.c.b16 %v1154, %v1153
        %v1176 = vpack.c.b16 %v1156, %v1155
        %v1177 = vpack.c.b16 %v1158, %v1157
        %v1178 = vpack.c.b16 %v1160, %v1159
        %v1179 = vpack.c.b16 %v1162, %v1161
        %v1180 = vpack.c.b16 %v1164, %v1163
        %v1197 = vunpack.c.l.b16 %v515
        %v1198 = vunpack.c.l.b16 %v525
        %v1199 = vunpack.c.l.b16 %v539
        %v1200 = vunpack.c.l.b16 %v549
        %v1201 = vunpack.c.l.b16 %v563
        %v1202 = vunpack.c.l.b16 %v573
        %v1203 = vunpack.c.l.b16 %v587
        %v1204 = vunpack.c.l.b16 %v597
        %v1205 = vunpack.c.l.b16 %v611
        %v1206 = vunpack.c.l.b16 %v621
        %v1207 = vunpack.c.l.b16 %v635
        %v1208 = vunpack.c.l.b16 %v645
        %v1209 = vunpack.c.l.b16 %v659
        %v1210 = vunpack.c.l.b16 %v669
        %v1211 = vunpack.c.l.b16 %v683
        %v1212 = vunpack.c.l.b16 %v693
        %v1213 = vunpack.c.l.b16 %v707
        %v1214 = vunpack.c.l.b16 %v717
        %v1215 = vunpack.c.l.b16 %v731
        %v1216 = vunpack.c.l.b16 %v741
        %v1217 = vunpack.c.l.b16 %v755
        %v1218 = vunpack.c.l.b16 %v765
        %v1219 = vunpack.c.l.b16 %v779
        %v1220 = vunpack.c.l.b16 %v789
        %v1221 = vunpack.c.l.b16 %v803
        %v1222 = vunpack.c.l.b16 %v813
        %v1223 = vunpack.c.l.b16 %v827
        %v1224 = vunpack.c.l.b16 %v837
        %v1225 = vunpack.c.l.b16 %v851
        %v1226 = vunpack.c.l.b16 %v861
        %v1227 = vunpack.c.l.b16 %v875
        %v1228 = vunpack.c.l.b16 %v885
        %v1229 = vpack.c.b16 %v1198, %v1197
        %v1230 = vpack.c.b16 %v1200, %v1199
        %v1231 = vpack.c.b16 %v1202, %v1201
        %v1232 = vpack.c.b16 %v1204, %v1203
        %v1233 = vpack.c.b16 %v1206, %v1205
        %v1234 = vpack.c.b16 %v1208, %v1207
        %v1235 = vpack.c.b16 %v1210, %v1209
        %v1236 = vpack.c.b16 %v1212, %v1211
        %v1237 = vpack.c.b16 %v1214, %v1213
        %v1238 = vpack.c.b16 %v1216, %v1215
        %v1239 = vpack.c.b16 %v1218, %v1217
        %v1240 = vpack.c.b16 %v1220, %v1219
        %v1241 = vpack.c.b16 %v1222, %v1221
        %v1242 = vpack.c.b16 %v1224, %v1223
        %v1243 = vpack.c.b16 %v1226, %v1225
        %v1244 = vpack.c.b16 %v1228, %v1227
        %v1261 = vunpack.c.l.b16 %v940
        %v1262 = vunpack.c.l.b16 %v943
        %v1263 = vunpack.c.l.b16 %v947
        %v1264 = vunpack.c.l.b16 %v950
        %v1265 = vunpack.c.l.b16 %v954
        %v1266 = vunpack.c.l.b16 %v957
        %v1267 = vunpack.c.l.b16 %v961
        %v1268 = vunpack.c.l.b16 %v964
        %v1269 = vunpack.c.l.b16 %v968
        %v1270 = vunpack.c.l.b16 %v971
        %v1271 = vunpack.c.l.b16 %v975
        %v1272 = vunpack.c.l.b16 %v978
        %v1273 = vunpack.c.l.b16 %v982
        %v1274 = vunpack.c.l.b16 %v985
        %v1275 = vunpack.c.l.b16 %v989
        %v1276 = vunpack.c.l.b16 %v992
        %v1277 = vunpack.c.l.b16 %v996
        %v1278 = vunpack.c.l.b16 %v999
        %v1279 = vunpack.c.l.b16 %v1003
        %v1280 = vunpack.c.l.b16 %v1006
        %v1281 = vunpack.c.l.b16 %v1010
        %v1282 = vunpack.c.l.b16 %v1013
        %v1283 = vunpack.c.l.b16 %v1017
        %v1284 = vunpack.c.l.b16 %v1020
        %v1285 = vunpack.c.l.b16 %v1024
        %v1286 = vunpack.c.l.b16 %v1027
        %v1287 = vunpack.c.l.b16 %v1031
        %v1288 = vunpack.c.l.b16 %v1034
        %v1289 = vunpack.c.l.b16 %v1038
        %v1290 = vunpack.c.l.b16 %v1041
        %v1291 = vunpack.c.l.b16 %v1045
        %v1292 = vunpack.c.l.b16 %v1048
        %v1293 = vpack.c.b16 %v1262, %v1261
        %v1294 = vpack.c.b16 %v1264, %v1263
        %v1295 = vpack.c.b16 %v1266, %v1265
        %v1296 = vpack.c.b16 %v1268, %v1267
        %v1297 = vpack.c.b16 %v1270, %v1269
        %v1298 = vpack.c.b16 %v1272, %v1271
        %v1299 = vpack.c.b16 %v1274, %v1273
        %v1300 = vpack.c.b16 %v1276, %v1275
        %v1301 = vpack.c.b16 %v1278, %v1277
        %v1302 = vpack.c.b16 %v1280, %v1279
        %v1303 = vpack.c.b16 %v1282, %v1281
        %v1304 = vpack.c.b16 %v1284, %v1283
        %v1305 = vpack.c.b16 %v1286, %v1285
        %v1306 = vpack.c.b16 %v1288, %v1287
        %v1307 = vpack.c.b16 %v1290, %v1289
        %v1308 = vpack.c.b16 %v1292, %v1291
        %v1326 = vunpack.c.l.b16 %v459
        %v1327 = vunpack.c.l.b16 %v460
        %v1328 = vpack.c.b16 %v1327, %v1326
        %v1330 = vunpack.c.l.b16 %v1062
        %v1331 = vunpack.c.l.b16 %v1072
        %v1332 = vpack.c.b16 %v1331, %v1330
        %v1334 = vunpack.c.l.b16 %v1079
        %v1335 = vunpack.c.l.b16 %v1082
        %v1336 = vpack.c.b16 %v1335, %v1334
        %v1339 = vunpack.c.l.b16 %v461
        %v1340 = vunpack.c.l.b16 %v462
        %v1341 = vpack.c.b16 %v1340, %v1339
        %v1343 = vunpack.c.l.b16 %v1096
        %v1344 = vunpack.c.l.b16 %v1106
        %v1345 = vpack.c.b16 %v1344, %v1343
        %v1347 = vunpack.c.l.b16 %v1113
        %v1348 = vunpack.c.l.b16 %v1116
        %v1349 = vpack.c.b16 %v1348, %v1347
        %v1351 = vld [vmem:[%s405] sm:$0xf]
        %v1352 = vld [vmem:[%s405 + $0x4] sm:$0xf]
        %v1353 = vld [vmem:[%s405 + $0x8] sm:$0xf]
        %v1354 = vld [vmem:[%s405 + $0xc] sm:$0xf]
        %v1355 = vld [vmem:[%s405 + $0x10] sm:$0xf]
        %v1356 = vld [vmem:[%s405 + $0x14] sm:$0xf]
        %v1357 = vld [vmem:[%s405 + $0x18] sm:$0xf]
        %v1358 = vld [vmem:[%s405 + $0x1c] sm:$0xf]
        %v1359 = vld [vmem:[%s405 + $0x20] sm:$0xf]
        %v1360 = vld [vmem:[%s405 + $0x24] sm:$0xf]
        %v1361 = vld [vmem:[%s405 + $0x28] sm:$0xf]
        %v1362 = vld [vmem:[%s405 + $0x2c] sm:$0xf]
        %v1363 = vld [vmem:[%s405 + $0x30] sm:$0xf]
        %v1364 = vld [vmem:[%s405 + $0x34] sm:$0xf]
        %v1365 = vld [vmem:[%s405 + $0x38] sm:$0xf]
        %v1366 = vld [vmem:[%s405 + $0x3c] sm:$0xf]
        %v1367 = vld [vmem:[%s405 + $0x40] sm:$0xf]
        %v1368 = vld [vmem:[%s405 + $0x44] sm:$0xf]
        %v1369 = vld [vmem:[%s405 + $0x48] sm:$0xf]
        %v1370 = vld [vmem:[%s405 + $0x4c] sm:$0xf]
        %v1371 = vld [vmem:[%s405 + $0x50] sm:$0xf]
        %v1372 = vld [vmem:[%s405 + $0x54] sm:$0xf]
        %v1373 = vld [vmem:[%s405 + $0x58] sm:$0xf]
        %v1374 = vld [vmem:[%s405 + $0x5c] sm:$0xf]
        %v1375 = vld [vmem:[%s405 + $0x60] sm:$0xf]
        %v1376 = vld [vmem:[%s405 + $0x64] sm:$0xf]
        %v1377 = vld [vmem:[%s405 + $0x68] sm:$0xf]
        %v1378 = vld [vmem:[%s405 + $0x6c] sm:$0xf]
        %v1379 = vld [vmem:[%s405 + $0x70] sm:$0xf]
        %v1380 = vld [vmem:[%s405 + $0x74] sm:$0xf]
        %v1381 = vld [vmem:[%s405 + $0x78] sm:$0xf]
        %v1382 = vld [vmem:[%s405 + $0x7c] sm:$0xf]
        %v1383 = vld [vmem:[%s405 + $0x80] sm:$0xf]
        %v1384 = vld [vmem:[%s405 + $0x84] sm:$0xf]
        %v1385 = vld [vmem:[%s405 + $0x88] sm:$0xf]
        %v1386 = vld [vmem:[%s405 + $0x8c] sm:$0xf]
        %v1387 = vld [vmem:[%s405 + $0x90] sm:$0xf]
        %v1388 = vld [vmem:[%s405 + $0x94] sm:$0xf]
        %v1389 = vld [vmem:[%s405 + $0x98] sm:$0xf]
        %v1390 = vld [vmem:[%s405 + $0x9c] sm:$0xf]
        %v1391 = vld [vmem:[%s405 + $0xa0] sm:$0xf]
        %v1392 = vld [vmem:[%s405 + $0xa4] sm:$0xf]
        %v1393 = vld [vmem:[%s405 + $0xa8] sm:$0xf]
        %v1394 = vld [vmem:[%s405 + $0xac] sm:$0xf]
        %v1395 = vld [vmem:[%s405 + $0xb0] sm:$0xf]
        %v1396 = vld [vmem:[%s405 + $0xb4] sm:$0xf]
        %v1397 = vld [vmem:[%s405 + $0xb8] sm:$0xf]
        %v1398 = vld [vmem:[%s405 + $0xbc] sm:$0xf]
        %v1399 = vld [vmem:[%s405 + $0xc0] sm:$0xf]
        %v1400 = vld [vmem:[%s405 + $0xc4] sm:$0xf]
        %v1401 = vld [vmem:[%s405 + $0xc8] sm:$0xf]
        %v1402 = vld [vmem:[%s405 + $0xcc] sm:$0xf]
        %v1403 = vld [vmem:[%s405 + $0xd0] sm:$0xf]
        %v1404 = vld [vmem:[%s405 + $0xd4] sm:$0xf]
        %v1405 = vld [vmem:[%s405 + $0xd8] sm:$0xf]
        %v1406 = vld [vmem:[%s405 + $0xdc] sm:$0xf]
        %v1407 = vld [vmem:[%s405 + $0xe0] sm:$0xf]
        %v1408 = vld [vmem:[%s405 + $0xe4] sm:$0xf]
        %v1409 = vld [vmem:[%s405 + $0xe8] sm:$0xf]
        %v1410 = vld [vmem:[%s405 + $0xec] sm:$0xf]
        %v1411 = vld [vmem:[%s405 + $0xf0] sm:$0xf]
        %v1412 = vld [vmem:[%s405 + $0xf4] sm:$0xf]
        %v1413 = vld [vmem:[%s405 + $0xf8] sm:$0xf]
        %v1414 = vld [vmem:[%s405 + $0xfc] sm:$0xf]
        %v1415 = vld [vmem:[%s405 + $0x100] sm:$0xf]
        %v1416 = vld [vmem:[%s405 + $0x104] sm:$0xf]
        %v1417 = vld [vmem:[%s405 + $0x108] sm:$0xf]
        %v1418 = vld [vmem:[%s405 + $0x10c] sm:$0xf]
        %v1419 = vld [vmem:[%s405 + $0x110] sm:$0xf]
        %v1420 = vld [vmem:[%s405 + $0x114] sm:$0xf]
        %v1421 = vld [vmem:[%s405 + $0x118] sm:$0xf]
        %v1422 = vld [vmem:[%s405 + $0x11c] sm:$0xf]
        %v1423 = vld [vmem:[%s405 + $0x120] sm:$0xf]
        %v1424 = vld [vmem:[%s405 + $0x124] sm:$0xf]
        %v1425 = vld [vmem:[%s405 + $0x128] sm:$0xf]
        %v1426 = vld [vmem:[%s405 + $0x12c] sm:$0xf]
        %v1427 = vld [vmem:[%s405 + $0x130] sm:$0xf]
        %v1428 = vld [vmem:[%s405 + $0x134] sm:$0xf]
        %v1429 = vld [vmem:[%s405 + $0x138] sm:$0xf]
        %v1430 = vld [vmem:[%s405 + $0x13c] sm:$0xf]
        %v1431 = vld [vmem:[%s405 + $0x140] sm:$0xf]
        %v1432 = vld [vmem:[%s405 + $0x144] sm:$0xf]
        %v1433 = vld [vmem:[%s405 + $0x148] sm:$0xf]
        %v1434 = vld [vmem:[%s405 + $0x14c] sm:$0xf]
        %v1435 = vld [vmem:[%s405 + $0x150] sm:$0xf]
        %v1436 = vld [vmem:[%s405 + $0x154] sm:$0xf]
        %v1437 = vld [vmem:[%s405 + $0x158] sm:$0xf]
        %v1438 = vld [vmem:[%s405 + $0x15c] sm:$0xf]
        %v1439 = vld [vmem:[%s405 + $0x160] sm:$0xf]
        %v1440 = vld [vmem:[%s405 + $0x164] sm:$0xf]
        %v1441 = vld [vmem:[%s405 + $0x168] sm:$0xf]
        %v1442 = vld [vmem:[%s405 + $0x16c] sm:$0xf]
        %v1443 = vld [vmem:[%s405 + $0x170] sm:$0xf]
        %v1444 = vld [vmem:[%s405 + $0x174] sm:$0xf]
        %v1445 = vld [vmem:[%s405 + $0x178] sm:$0xf]
        %v1446 = vld [vmem:[%s405 + $0x17c] sm:$0xf]
        %v1447 = vld [vmem:[%s405 + $0x180] sm:$0xf]
        %v1448 = vld [vmem:[%s405 + $0x184] sm:$0xf]
        %v1449 = vld [vmem:[%s405 + $0x188] sm:$0xf]
        %v1450 = vld [vmem:[%s405 + $0x18c] sm:$0xf]
        %v1451 = vld [vmem:[%s405 + $0x190] sm:$0xf]
        %v1452 = vld [vmem:[%s405 + $0x194] sm:$0xf]
        %v1453 = vld [vmem:[%s405 + $0x198] sm:$0xf]
        %v1454 = vld [vmem:[%s405 + $0x19c] sm:$0xf]
        %v1455 = vld [vmem:[%s405 + $0x1a0] sm:$0xf]
        %v1456 = vld [vmem:[%s405 + $0x1a4] sm:$0xf]
        %v1457 = vld [vmem:[%s405 + $0x1a8] sm:$0xf]
        %v1458 = vld [vmem:[%s405 + $0x1ac] sm:$0xf]
        %v1459 = vld [vmem:[%s405 + $0x1b0] sm:$0xf]
        %v1460 = vld [vmem:[%s405 + $0x1b4] sm:$0xf]
        %v1461 = vld [vmem:[%s405 + $0x1b8] sm:$0xf]
        %v1462 = vld [vmem:[%s405 + $0x1bc] sm:$0xf]
        %v1463 = vld [vmem:[%s405 + $0x1c0] sm:$0xf]
        %v1464 = vld [vmem:[%s405 + $0x1c4] sm:$0xf]
        %v1465 = vld [vmem:[%s405 + $0x1c8] sm:$0xf]
        %v1466 = vld [vmem:[%s405 + $0x1cc] sm:$0xf]
        %v1467 = vld [vmem:[%s405 + $0x1d0] sm:$0xf]
        %v1468 = vld [vmem:[%s405 + $0x1d4] sm:$0xf]
        %v1469 = vld [vmem:[%s405 + $0x1d8] sm:$0xf]
        %v1470 = vld [vmem:[%s405 + $0x1dc] sm:$0xf]
        %v1471 = vld [vmem:[%s405 + $0x1e0] sm:$0xf]
        %v1472 = vld [vmem:[%s405 + $0x1e4] sm:$0xf]
        %v1473 = vld [vmem:[%s405 + $0x1e8] sm:$0xf]
        %v1474 = vld [vmem:[%s405 + $0x1ec] sm:$0xf]
        %v1475 = vld [vmem:[%s405 + $0x1f0] sm:$0xf]
        %v1476 = vld [vmem:[%s405 + $0x1f4] sm:$0xf]
        %v1477 = vld [vmem:[%s405 + $0x1f8] sm:$0xf]
        %v1478 = vld [vmem:[%s405 + $0x1fc] sm:$0xf]
        %v1479 = vld [vmem:[%s405 + $0x200] sm:$0xf]
        %v1480 = vld [vmem:[%s405 + $0x204] sm:$0xf]
        %v1481 = vld [vmem:[%s405 + $0x208] sm:$0xf]
        %v1482 = vld [vmem:[%s405 + $0x20c] sm:$0xf]
        %v1483 = vld [vmem:[%s405 + $0x210] sm:$0xf]
        %v1484 = vld [vmem:[%s405 + $0x214] sm:$0xf]
        %v1485 = vld [vmem:[%s405 + $0x218] sm:$0xf]
        %v1486 = vld [vmem:[%s405 + $0x21c] sm:$0xf]
        %v1487 = vld [vmem:[%s405 + $0x220] sm:$0xf]
        %v1488 = vld [vmem:[%s405 + $0x224] sm:$0xf]
        %v1489 = vld [vmem:[%s405 + $0x228] sm:$0xf]
        %v1490 = vld [vmem:[%s405 + $0x22c] sm:$0xf]
        %v1491 = vld [vmem:[%s405 + $0x230] sm:$0xf]
        %v1492 = vld [vmem:[%s405 + $0x234] sm:$0xf]
        %v1493 = vld [vmem:[%s405 + $0x238] sm:$0xf]
        %v1494 = vld [vmem:[%s405 + $0x23c] sm:$0xf]
        %v1495 = vld [vmem:[%s408] sm:$0x1]
        %v1497 = vperm.slane %v1495, 0
        %v1643 = vunpack.c.l.b16 %v1351
        %v1644 = vunpack.c.l.b16 %v1352
        %v1645 = vunpack.c.l.b16 %v1353
        %v1646 = vunpack.c.l.b16 %v1354
        %v1647 = vunpack.c.l.b16 %v1355
        %v1648 = vunpack.c.l.b16 %v1356
        %v1649 = vunpack.c.l.b16 %v1357
        %v1650 = vunpack.c.l.b16 %v1358
        %v1651 = vunpack.c.l.b16 %v1359
        %v1652 = vunpack.c.l.b16 %v1360
        %v1653 = vunpack.c.l.b16 %v1361
        %v1654 = vunpack.c.l.b16 %v1362
        %v1655 = vunpack.c.l.b16 %v1363
        %v1656 = vunpack.c.l.b16 %v1364
        %v1657 = vunpack.c.l.b16 %v1365
        %v1658 = vunpack.c.l.b16 %v1366
        %v1659 = vunpack.c.l.b16 %v1367
        %v1660 = vunpack.c.l.b16 %v1368
        %v1661 = vunpack.c.l.b16 %v1369
        %v1662 = vunpack.c.l.b16 %v1370
        %v1663 = vunpack.c.l.b16 %v1371
        %v1664 = vunpack.c.l.b16 %v1372
        %v1665 = vunpack.c.l.b16 %v1373
        %v1666 = vunpack.c.l.b16 %v1374
        %v1667 = vunpack.c.l.b16 %v1375
        %v1668 = vunpack.c.l.b16 %v1376
        %v1669 = vunpack.c.l.b16 %v1377
        %v1670 = vunpack.c.l.b16 %v1378
        %v1671 = vunpack.c.l.b16 %v1379
        %v1672 = vunpack.c.l.b16 %v1380
        %v1673 = vunpack.c.l.b16 %v1381
        %v1674 = vunpack.c.l.b16 %v1382
        %v1675 = vunpack.c.l.b16 %v1383
        %v1676 = vunpack.c.l.b16 %v1384
        %v1677 = vunpack.c.l.b16 %v1385
        %v1678 = vunpack.c.l.b16 %v1386
        %v1679 = vunpack.c.l.b16 %v1387
        %v1680 = vunpack.c.l.b16 %v1388
        %v1681 = vunpack.c.l.b16 %v1389
        %v1682 = vunpack.c.l.b16 %v1390
        %v1683 = vunpack.c.l.b16 %v1391
        %v1684 = vunpack.c.l.b16 %v1392
        %v1685 = vunpack.c.l.b16 %v1393
        %v1686 = vunpack.c.l.b16 %v1394
        %v1687 = vunpack.c.l.b16 %v1395
        %v1688 = vunpack.c.l.b16 %v1396
        %v1689 = vunpack.c.l.b16 %v1397
        %v1690 = vunpack.c.l.b16 %v1398
        %v1691 = vunpack.c.l.b16 %v1399
        %v1692 = vunpack.c.l.b16 %v1400
        %v1693 = vunpack.c.l.b16 %v1401
        %v1694 = vunpack.c.l.b16 %v1402
        %v1695 = vunpack.c.l.b16 %v1403
        %v1696 = vunpack.c.l.b16 %v1404
        %v1697 = vunpack.c.l.b16 %v1405
        %v1698 = vunpack.c.l.b16 %v1406
        %v1699 = vunpack.c.l.b16 %v1407
        %v1700 = vunpack.c.l.b16 %v1408
        %v1701 = vunpack.c.l.b16 %v1409
        %v1702 = vunpack.c.l.b16 %v1410
        %v1703 = vunpack.c.l.b16 %v1411
        %v1704 = vunpack.c.l.b16 %v1412
        %v1705 = vunpack.c.l.b16 %v1413
        %v1706 = vunpack.c.l.b16 %v1414
        %v1707 = vunpack.c.l.b16 %v1415
        %v1708 = vunpack.c.l.b16 %v1416
        %v1709 = vunpack.c.l.b16 %v1417
        %v1710 = vunpack.c.l.b16 %v1418
        %v1711 = vunpack.c.l.b16 %v1419
        %v1712 = vunpack.c.l.b16 %v1420
        %v1713 = vunpack.c.l.b16 %v1421
        %v1714 = vunpack.c.l.b16 %v1422
        %v1715 = vunpack.c.l.b16 %v1423
        %v1716 = vunpack.c.l.b16 %v1424
        %v1717 = vunpack.c.l.b16 %v1425
        %v1718 = vunpack.c.l.b16 %v1426
        %v1719 = vunpack.c.l.b16 %v1427
        %v1720 = vunpack.c.l.b16 %v1428
        %v1721 = vunpack.c.l.b16 %v1429
        %v1722 = vunpack.c.l.b16 %v1430
        %v1723 = vunpack.c.l.b16 %v1431
        %v1724 = vunpack.c.l.b16 %v1432
        %v1725 = vunpack.c.l.b16 %v1433
        %v1726 = vunpack.c.l.b16 %v1434
        %v1727 = vunpack.c.l.b16 %v1435
        %v1728 = vunpack.c.l.b16 %v1436
        %v1729 = vunpack.c.l.b16 %v1437
        %v1730 = vunpack.c.l.b16 %v1438
        %v1731 = vunpack.c.l.b16 %v1439
        %v1732 = vunpack.c.l.b16 %v1440
        %v1733 = vunpack.c.l.b16 %v1441
        %v1734 = vunpack.c.l.b16 %v1442
        %v1735 = vunpack.c.l.b16 %v1443
        %v1736 = vunpack.c.l.b16 %v1444
        %v1737 = vunpack.c.l.b16 %v1445
        %v1738 = vunpack.c.l.b16 %v1446
        %v1739 = vunpack.c.l.b16 %v1447
        %v1740 = vunpack.c.l.b16 %v1448
        %v1741 = vunpack.c.l.b16 %v1449
        %v1742 = vunpack.c.l.b16 %v1450
        %v1743 = vunpack.c.l.b16 %v1451
        %v1744 = vunpack.c.l.b16 %v1452
        %v1745 = vunpack.c.l.b16 %v1453
        %v1746 = vunpack.c.l.b16 %v1454
        %v1747 = vunpack.c.l.b16 %v1455
        %v1748 = vunpack.c.l.b16 %v1456
        %v1749 = vunpack.c.l.b16 %v1457
        %v1750 = vunpack.c.l.b16 %v1458
        %v1751 = vunpack.c.l.b16 %v1459
        %v1752 = vunpack.c.l.b16 %v1460
        %v1753 = vunpack.c.l.b16 %v1461
        %v1754 = vunpack.c.l.b16 %v1462
        %v1755 = vunpack.c.l.b16 %v1463
        %v1756 = vunpack.c.l.b16 %v1464
        %v1757 = vunpack.c.l.b16 %v1465
        %v1758 = vunpack.c.l.b16 %v1466
        %v1759 = vunpack.c.l.b16 %v1467
        %v1760 = vunpack.c.l.b16 %v1468
        %v1761 = vunpack.c.l.b16 %v1469
        %v1762 = vunpack.c.l.b16 %v1470
        %v1763 = vunpack.c.l.b16 %v1471
        %v1764 = vunpack.c.l.b16 %v1472
        %v1765 = vunpack.c.l.b16 %v1473
        %v1766 = vunpack.c.l.b16 %v1474
        %v1767 = vunpack.c.l.b16 %v1475
        %v1768 = vunpack.c.l.b16 %v1476
        %v1769 = vunpack.c.l.b16 %v1477
        %v1770 = vunpack.c.l.b16 %v1478
        %v1771 = vunpack.c.l.b16 %v1479
        %v1772 = vunpack.c.l.b16 %v1480
        %v1773 = vunpack.c.l.b16 %v1481
        %v1774 = vunpack.c.l.b16 %v1482
        %v1775 = vunpack.c.l.b16 %v1483
        %v1776 = vunpack.c.l.b16 %v1484
        %v1777 = vunpack.c.l.b16 %v1485
        %v1778 = vunpack.c.l.b16 %v1486
        %v1779 = vunpack.c.l.b16 %v1487
        %v1780 = vunpack.c.l.b16 %v1488
        %v1781 = vunpack.c.l.b16 %v1489
        %v1782 = vunpack.c.l.b16 %v1490
        %v1783 = vunpack.c.l.b16 %v1491
        %v1784 = vunpack.c.l.b16 %v1492
        %v1785 = vunpack.c.l.b16 %v1493
        %v1786 = vunpack.c.l.b16 %v1494
        %v1787 = vpack.c.b16 %v1644, %v1643
        %v1788 = vpack.c.b16 %v1646, %v1645
        %v1789 = vpack.c.b16 %v1648, %v1647
        %v1790 = vpack.c.b16 %v1650, %v1649
        %v1791 = vpack.c.b16 %v1652, %v1651
        %v1792 = vpack.c.b16 %v1654, %v1653
        %v1793 = vpack.c.b16 %v1656, %v1655
        %v1794 = vpack.c.b16 %v1658, %v1657
        %v1795 = vpack.c.b16 %v1660, %v1659
        %v1796 = vpack.c.b16 %v1662, %v1661
        %v1797 = vpack.c.b16 %v1664, %v1663
        %v1798 = vpack.c.b16 %v1666, %v1665
        %v1799 = vpack.c.b16 %v1668, %v1667
        %v1800 = vpack.c.b16 %v1670, %v1669
        %v1801 = vpack.c.b16 %v1672, %v1671
        %v1802 = vpack.c.b16 %v1674, %v1673
        %v1803 = vpack.c.b16 %v1676, %v1675
        %v1804 = vpack.c.b16 %v1678, %v1677
        %v1805 = vpack.c.b16 %v1680, %v1679
        %v1806 = vpack.c.b16 %v1682, %v1681
        %v1807 = vpack.c.b16 %v1684, %v1683
        %v1808 = vpack.c.b16 %v1686, %v1685
        %v1809 = vpack.c.b16 %v1688, %v1687
        %v1810 = vpack.c.b16 %v1690, %v1689
        %v1811 = vpack.c.b16 %v1692, %v1691
        %v1812 = vpack.c.b16 %v1694, %v1693
        %v1813 = vpack.c.b16 %v1696, %v1695
        %v1814 = vpack.c.b16 %v1698, %v1697
        %v1815 = vpack.c.b16 %v1700, %v1699
        %v1816 = vpack.c.b16 %v1702, %v1701
        %v1817 = vpack.c.b16 %v1704, %v1703
        %v1818 = vpack.c.b16 %v1706, %v1705
        %v1819 = vpack.c.b16 %v1708, %v1707
        %v1820 = vpack.c.b16 %v1710, %v1709
        %v1821 = vpack.c.b16 %v1712, %v1711
        %v1822 = vpack.c.b16 %v1714, %v1713
        %v1823 = vpack.c.b16 %v1716, %v1715
        %v1824 = vpack.c.b16 %v1718, %v1717
        %v1825 = vpack.c.b16 %v1720, %v1719
        %v1826 = vpack.c.b16 %v1722, %v1721
        %v1827 = vpack.c.b16 %v1724, %v1723
        %v1828 = vpack.c.b16 %v1726, %v1725
        %v1829 = vpack.c.b16 %v1728, %v1727
        %v1830 = vpack.c.b16 %v1730, %v1729
        %v1831 = vpack.c.b16 %v1732, %v1731
        %v1832 = vpack.c.b16 %v1734, %v1733
        %v1833 = vpack.c.b16 %v1736, %v1735
        %v1834 = vpack.c.b16 %v1738, %v1737
        %v1835 = vpack.c.b16 %v1740, %v1739
        %v1836 = vpack.c.b16 %v1742, %v1741
        %v1837 = vpack.c.b16 %v1744, %v1743
        %v1838 = vpack.c.b16 %v1746, %v1745
        %v1839 = vpack.c.b16 %v1748, %v1747
        %v1840 = vpack.c.b16 %v1750, %v1749
        %v1841 = vpack.c.b16 %v1752, %v1751
        %v1842 = vpack.c.b16 %v1754, %v1753
        %v1843 = vpack.c.b16 %v1756, %v1755
        %v1844 = vpack.c.b16 %v1758, %v1757
        %v1845 = vpack.c.b16 %v1760, %v1759
        %v1846 = vpack.c.b16 %v1762, %v1761
        %v1847 = vpack.c.b16 %v1764, %v1763
        %v1848 = vpack.c.b16 %v1766, %v1765
        %v1849 = vpack.c.b16 %v1768, %v1767
        %v1850 = vpack.c.b16 %v1770, %v1769
        %v1851 = vpack.c.b16 %v1772, %v1771
        %v1852 = vpack.c.b16 %v1774, %v1773
        %v1853 = vpack.c.b16 %v1776, %v1775
        %v1854 = vpack.c.b16 %v1778, %v1777
        %v1855 = vpack.c.b16 %v1780, %v1779
        %v1856 = vpack.c.b16 %v1782, %v1781
        %v1857 = vpack.c.b16 %v1784, %v1783
        %v1858 = vpack.c.b16 %v1786, %v1785
        %1931 = vmatpush.bf16.msra.mxu0 %v1794
        %1932 = vmatpush.bf16.msra.mxu0 %v1793
        %1933 = vmatpush.bf16.msra.mxu0 %v1792
        %1934 = vmatpush.bf16.msra.mxu0 %v1791
        %1935 = vmatpush.bf16.msra.mxu0 %v1790
        %1936 = vmatpush.bf16.msra.mxu0 %v1789
        %1937 = vmatpush.bf16.msra.mxu0 %v1788
        %1938 = vmatpush.bf16.msra.mxu0 %v1787
        %1939 = vmatmul.bf16.gmra.mxu0 %v1165
        %v1940 = vpop.f32.mrf.mxu0
        %v1941 = vadd.f32 %v1497, %v1940
        %v1942 = vpop.f32.mrf.mxu0
        %v1943 = vadd.f32 %v1497, %v1942
        %1944 = vmatmul.bf16.gmra.mxu0 %v1166
        %v1945 = vpop.f32.mrf.mxu0
        %v1946 = vadd.f32 %v1497, %v1945
        %v1947 = vpop.f32.mrf.mxu0
        %v1948 = vadd.f32 %v1497, %v1947
        %1949 = vmatmul.bf16.gmra.mxu0 %v1167
        %v1950 = vpop.f32.mrf.mxu0
        %v1951 = vadd.f32 %v1497, %v1950
        %v1952 = vpop.f32.mrf.mxu0
        %v1953 = vadd.f32 %v1497, %v1952
        %1954 = vmatmul.bf16.gmra.mxu0 %v1168
        %v1955 = vpop.f32.mrf.mxu0
        %v1956 = vadd.f32 %v1497, %v1955
        %v1957 = vpop.f32.mrf.mxu0
        %v1958 = vadd.f32 %v1497, %v1957
        %1959 = vmatmul.bf16.gmra.mxu0 %v1169
        %v1960 = vpop.f32.mrf.mxu0
        %v1961 = vadd.f32 %v1497, %v1960
        %v1962 = vpop.f32.mrf.mxu0
        %v1963 = vadd.f32 %v1497, %v1962
        %1964 = vmatmul.bf16.gmra.mxu0 %v1170
        %v1965 = vpop.f32.mrf.mxu0
        %v1966 = vadd.f32 %v1497, %v1965
        %v1967 = vpop.f32.mrf.mxu0
        %v1968 = vadd.f32 %v1497, %v1967
        %1969 = vmatmul.bf16.gmra.mxu0 %v1171
        %v1970 = vpop.f32.mrf.mxu0
        %v1971 = vadd.f32 %v1497, %v1970
        %v1972 = vpop.f32.mrf.mxu0
        %v1973 = vadd.f32 %v1497, %v1972
        %1974 = vmatmul.bf16.gmra.mxu0 %v1172
        %v1975 = vpop.f32.mrf.mxu0
        %v1976 = vadd.f32 %v1497, %v1975
        %v1977 = vpop.f32.mrf.mxu0
        %v1978 = vadd.f32 %v1497, %v1977
        %1979 = vmatmul.bf16.gmra.mxu0 %v1173
        %v1980 = vpop.f32.mrf.mxu0
        %v1981 = vadd.f32 %v1497, %v1980
        %v1982 = vpop.f32.mrf.mxu0
        %v1983 = vadd.f32 %v1497, %v1982
        %1984 = vmatmul.bf16.gmra.mxu0 %v1174
        %v1985 = vpop.f32.mrf.mxu0
        %v1986 = vadd.f32 %v1497, %v1985
        %v1987 = vpop.f32.mrf.mxu0
        %v1988 = vadd.f32 %v1497, %v1987
        %1989 = vmatmul.bf16.gmra.mxu0 %v1175
        %v1990 = vpop.f32.mrf.mxu0
        %v1991 = vadd.f32 %v1497, %v1990
        %v1992 = vpop.f32.mrf.mxu0
        %v1993 = vadd.f32 %v1497, %v1992
        %1994 = vmatmul.bf16.gmra.mxu0 %v1176
        %v1995 = vpop.f32.mrf.mxu0
        %v1996 = vadd.f32 %v1497, %v1995
        %v1997 = vpop.f32.mrf.mxu0
        %v1998 = vadd.f32 %v1497, %v1997
        %1999 = vmatmul.bf16.gmra.mxu0 %v1177
        %v2000 = vpop.f32.mrf.mxu0
        %v2001 = vadd.f32 %v1497, %v2000
        %v2002 = vpop.f32.mrf.mxu0
        %v2003 = vadd.f32 %v1497, %v2002
        %2004 = vmatmul.bf16.gmra.mxu0 %v1178
        %v2005 = vpop.f32.mrf.mxu0
        %v2006 = vadd.f32 %v1497, %v2005
        %v2007 = vpop.f32.mrf.mxu0
        %v2008 = vadd.f32 %v1497, %v2007
        %2009 = vmatmul.bf16.gmra.mxu0 %v1179
        %v2010 = vpop.f32.mrf.mxu0
        %v2011 = vadd.f32 %v1497, %v2010
        %v2012 = vpop.f32.mrf.mxu0
        %v2013 = vadd.f32 %v1497, %v2012
        %2014 = vmatmul.bf16.gmra.mxu0 %v1180
        %v2015 = vpop.f32.mrf.mxu0
        %v2016 = vadd.f32 %v1497, %v2015
        %v2017 = vpop.f32.mrf.mxu0
        %v2018 = vadd.f32 %v1497, %v2017
        %2019 = vdwg.mxu0
        %2020 = vmatpush.bf16.msra.mxu0 %v1802
        %2021 = vmatpush.bf16.msra.mxu0 %v1801
        %2022 = vmatpush.bf16.msra.mxu0 %v1800
        %2023 = vmatpush.bf16.msra.mxu0 %v1799
        %2024 = vmatpush.bf16.msra.mxu0 %v1798
        %2025 = vmatpush.bf16.msra.mxu0 %v1797
        %2026 = vmatpush.bf16.msra.mxu0 %v1796
        %2027 = vmatpush.bf16.msra.mxu0 %v1795
        %2028 = vmatmul.bf16.gmra.mxu0 %v1229
        %v2029 = vpop.f32.mrf.mxu0
        %v2030 = vadd.f32 %v1941, %v2029
        %v2031 = vpop.f32.mrf.mxu0
        %v2032 = vadd.f32 %v1943, %v2031
        %2033 = vmatmul.bf16.gmra.mxu0 %v1230
        %v2034 = vpop.f32.mrf.mxu0
        %v2035 = vadd.f32 %v1946, %v2034
        %v2036 = vpop.f32.mrf.mxu0
        %v2037 = vadd.f32 %v1948, %v2036
        %2038 = vmatmul.bf16.gmra.mxu0 %v1231
        %v2039 = vpop.f32.mrf.mxu0
        %v2040 = vadd.f32 %v1951, %v2039
        %v2041 = vpop.f32.mrf.mxu0
        %v2042 = vadd.f32 %v1953, %v2041
        %2043 = vmatmul.bf16.gmra.mxu0 %v1232
        %v2044 = vpop.f32.mrf.mxu0
        %v2045 = vadd.f32 %v1956, %v2044
        %v2046 = vpop.f32.mrf.mxu0
        %v2047 = vadd.f32 %v1958, %v2046
        %2048 = vmatmul.bf16.gmra.mxu0 %v1233
        %v2049 = vpop.f32.mrf.mxu0
        %v2050 = vadd.f32 %v1961, %v2049
        %v2051 = vpop.f32.mrf.mxu0
        %v2052 = vadd.f32 %v1963, %v2051
        %2053 = vmatmul.bf16.gmra.mxu0 %v1234
        %v2054 = vpop.f32.mrf.mxu0
        %v2055 = vadd.f32 %v1966, %v2054
        %v2056 = vpop.f32.mrf.mxu0
        %v2057 = vadd.f32 %v1968, %v2056
        %2058 = vmatmul.bf16.gmra.mxu0 %v1235
        %v2059 = vpop.f32.mrf.mxu0
        %v2060 = vadd.f32 %v1971, %v2059
        %v2061 = vpop.f32.mrf.mxu0
        %v2062 = vadd.f32 %v1973, %v2061
        %2063 = vmatmul.bf16.gmra.mxu0 %v1236
        %v2064 = vpop.f32.mrf.mxu0
        %v2065 = vadd.f32 %v1976, %v2064
        %v2066 = vpop.f32.mrf.mxu0
        %v2067 = vadd.f32 %v1978, %v2066
        %2068 = vmatmul.bf16.gmra.mxu0 %v1237
        %v2069 = vpop.f32.mrf.mxu0
        %v2070 = vadd.f32 %v1981, %v2069
        %v2071 = vpop.f32.mrf.mxu0
        %v2072 = vadd.f32 %v1983, %v2071
        %2073 = vmatmul.bf16.gmra.mxu0 %v1238
        %v2074 = vpop.f32.mrf.mxu0
        %v2075 = vadd.f32 %v1986, %v2074
        %v2076 = vpop.f32.mrf.mxu0
        %v2077 = vadd.f32 %v1988, %v2076
        %2078 = vmatmul.bf16.gmra.mxu0 %v1239
        %v2079 = vpop.f32.mrf.mxu0
        %v2080 = vadd.f32 %v1991, %v2079
        %v2081 = vpop.f32.mrf.mxu0
        %v2082 = vadd.f32 %v1993, %v2081
        %2083 = vmatmul.bf16.gmra.mxu0 %v1240
        %v2084 = vpop.f32.mrf.mxu0
        %v2085 = vadd.f32 %v1996, %v2084
        %v2086 = vpop.f32.mrf.mxu0
        %v2087 = vadd.f32 %v1998, %v2086
        %2088 = vmatmul.bf16.gmra.mxu0 %v1241
        %v2089 = vpop.f32.mrf.mxu0
        %v2090 = vadd.f32 %v2001, %v2089
        %v2091 = vpop.f32.mrf.mxu0
        %v2092 = vadd.f32 %v2003, %v2091
        %2093 = vmatmul.bf16.gmra.mxu0 %v1242
        %v2094 = vpop.f32.mrf.mxu0
        %v2095 = vadd.f32 %v2006, %v2094
        %v2096 = vpop.f32.mrf.mxu0
        %v2097 = vadd.f32 %v2008, %v2096
        %2098 = vmatmul.bf16.gmra.mxu0 %v1243
        %v2099 = vpop.f32.mrf.mxu0
        %v2100 = vadd.f32 %v2011, %v2099
        %v2101 = vpop.f32.mrf.mxu0
        %v2102 = vadd.f32 %v2013, %v2101
        %2103 = vmatmul.bf16.gmra.mxu0 %v1244
        %v2104 = vpop.f32.mrf.mxu0
        %v2105 = vadd.f32 %v2016, %v2104
        %v2106 = vpop.f32.mrf.mxu0
        %v2107 = vadd.f32 %v2018, %v2106
        %2108 = vdwg.mxu0
        %2109 = vmatpush.bf16.msra.mxu0 %v1810
        %2110 = vmatpush.bf16.msra.mxu0 %v1809
        %2111 = vmatpush.bf16.msra.mxu0 %v1808
        %2112 = vmatpush.bf16.msra.mxu0 %v1807
        %2113 = vmatpush.bf16.msra.mxu0 %v1806
        %2114 = vmatpush.bf16.msra.mxu0 %v1805
        %2115 = vmatpush.bf16.msra.mxu0 %v1804
        %2116 = vmatpush.bf16.msra.mxu0 %v1803
        %2117 = vmatmul.bf16.gmra.mxu0 %v1293
        %v2118 = vpop.f32.mrf.mxu0
        %v2119 = vadd.f32 %v2030, %v2118
        %v2120 = vpop.f32.mrf.mxu0
        %v2121 = vadd.f32 %v2032, %v2120
        %2122 = vmatmul.bf16.gmra.mxu0 %v1294
        %v2123 = vpop.f32.mrf.mxu0
        %v2124 = vadd.f32 %v2035, %v2123
        %v2125 = vpop.f32.mrf.mxu0
        %v2126 = vadd.f32 %v2037, %v2125
        %2127 = vmatmul.bf16.gmra.mxu0 %v1295
        %v2128 = vpop.f32.mrf.mxu0
        %v2129 = vadd.f32 %v2040, %v2128
        %v2130 = vpop.f32.mrf.mxu0
        %v2131 = vadd.f32 %v2042, %v2130
        %2132 = vmatmul.bf16.gmra.mxu0 %v1296
        %v2133 = vpop.f32.mrf.mxu0
        %v2134 = vadd.f32 %v2045, %v2133
        %v2135 = vpop.f32.mrf.mxu0
        %v2136 = vadd.f32 %v2047, %v2135
        %2137 = vmatmul.bf16.gmra.mxu0 %v1297
        %v2138 = vpop.f32.mrf.mxu0
        %v2139 = vadd.f32 %v2050, %v2138
        %v2140 = vpop.f32.mrf.mxu0
        %v2141 = vadd.f32 %v2052, %v2140
        %2142 = vmatmul.bf16.gmra.mxu0 %v1298
        %v2143 = vpop.f32.mrf.mxu0
        %v2144 = vadd.f32 %v2055, %v2143
        %v2145 = vpop.f32.mrf.mxu0
        %v2146 = vadd.f32 %v2057, %v2145
        %2147 = vmatmul.bf16.gmra.mxu0 %v1299
        %v2148 = vpop.f32.mrf.mxu0
        %v2149 = vadd.f32 %v2060, %v2148
        %v2150 = vpop.f32.mrf.mxu0
        %v2151 = vadd.f32 %v2062, %v2150
        %2152 = vmatmul.bf16.gmra.mxu0 %v1300
        %v2153 = vpop.f32.mrf.mxu0
        %v2154 = vadd.f32 %v2065, %v2153
        %v2155 = vpop.f32.mrf.mxu0
        %v2156 = vadd.f32 %v2067, %v2155
        %2157 = vmatmul.bf16.gmra.mxu0 %v1301
        %v2158 = vpop.f32.mrf.mxu0
        %v2159 = vadd.f32 %v2070, %v2158
        %v2160 = vpop.f32.mrf.mxu0
        %v2161 = vadd.f32 %v2072, %v2160
        %2162 = vmatmul.bf16.gmra.mxu0 %v1302
        %v2163 = vpop.f32.mrf.mxu0
        %v2164 = vadd.f32 %v2075, %v2163
        %v2165 = vpop.f32.mrf.mxu0
        %v2166 = vadd.f32 %v2077, %v2165
        %2167 = vmatmul.bf16.gmra.mxu0 %v1303
        %v2168 = vpop.f32.mrf.mxu0
        %v2169 = vadd.f32 %v2080, %v2168
        %v2170 = vpop.f32.mrf.mxu0
        %v2171 = vadd.f32 %v2082, %v2170
        %2172 = vmatmul.bf16.gmra.mxu0 %v1304
        %v2173 = vpop.f32.mrf.mxu0
        %v2174 = vadd.f32 %v2085, %v2173
        %v2175 = vpop.f32.mrf.mxu0
        %v2176 = vadd.f32 %v2087, %v2175
        %2177 = vmatmul.bf16.gmra.mxu0 %v1305
        %v2178 = vpop.f32.mrf.mxu0
        %v2179 = vadd.f32 %v2090, %v2178
        %v2180 = vpop.f32.mrf.mxu0
        %v2181 = vadd.f32 %v2092, %v2180
        %2182 = vmatmul.bf16.gmra.mxu0 %v1306
        %v2183 = vpop.f32.mrf.mxu0
        %v2184 = vadd.f32 %v2095, %v2183
        %v2185 = vpop.f32.mrf.mxu0
        %v2186 = vadd.f32 %v2097, %v2185
        %2187 = vmatmul.bf16.gmra.mxu0 %v1307
        %v2188 = vpop.f32.mrf.mxu0
        %v2189 = vadd.f32 %v2100, %v2188
        %v2190 = vpop.f32.mrf.mxu0
        %v2191 = vadd.f32 %v2102, %v2190
        %2192 = vmatmul.bf16.gmra.mxu0 %v1308
        %v2193 = vpop.f32.mrf.mxu0
        %v2194 = vadd.f32 %v2105, %v2193
        %v2195 = vpop.f32.mrf.mxu0
        %v2196 = vadd.f32 %v2107, %v2195
        %2197 = vdwg.mxu0
        %2198 = vmatpush.bf16.msra.mxu0 %v1818
        %2199 = vmatpush.bf16.msra.mxu0 %v1817
        %2200 = vmatpush.bf16.msra.mxu0 %v1816
        %2201 = vmatpush.bf16.msra.mxu0 %v1815
        %2202 = vmatpush.bf16.msra.mxu0 %v1814
        %2203 = vmatpush.bf16.msra.mxu0 %v1813
        %2204 = vmatpush.bf16.msra.mxu0 %v1812
        %2205 = vmatpush.bf16.msra.mxu0 %v1811
        %2206 = vmatmul.bf16.gmra.mxu0 %v1166
        %v2207 = vpop.f32.mrf.mxu0
        %v2208 = vadd.f32 %v2119, %v2207
        %v2209 = vpop.f32.mrf.mxu0
        %v2210 = vadd.f32 %v2121, %v2209
        %2211 = vmatmul.bf16.gmra.mxu0 %v1167
        %v2212 = vpop.f32.mrf.mxu0
        %v2213 = vadd.f32 %v2124, %v2212
        %v2214 = vpop.f32.mrf.mxu0
        %v2215 = vadd.f32 %v2126, %v2214
        %2216 = vmatmul.bf16.gmra.mxu0 %v1168
        %v2217 = vpop.f32.mrf.mxu0
        %v2218 = vadd.f32 %v2129, %v2217
        %v2219 = vpop.f32.mrf.mxu0
        %v2220 = vadd.f32 %v2131, %v2219
        %2221 = vmatmul.bf16.gmra.mxu0 %v1169
        %v2222 = vpop.f32.mrf.mxu0
        %v2223 = vadd.f32 %v2134, %v2222
        %v2224 = vpop.f32.mrf.mxu0
        %v2225 = vadd.f32 %v2136, %v2224
        %2226 = vmatmul.bf16.gmra.mxu0 %v1170
        %v2227 = vpop.f32.mrf.mxu0
        %v2228 = vadd.f32 %v2139, %v2227
        %v2229 = vpop.f32.mrf.mxu0
        %v2230 = vadd.f32 %v2141, %v2229
        %2231 = vmatmul.bf16.gmra.mxu0 %v1171
        %v2232 = vpop.f32.mrf.mxu0
        %v2233 = vadd.f32 %v2144, %v2232
        %v2234 = vpop.f32.mrf.mxu0
        %v2235 = vadd.f32 %v2146, %v2234
        %2236 = vmatmul.bf16.gmra.mxu0 %v1172
        %v2237 = vpop.f32.mrf.mxu0
        %v2238 = vadd.f32 %v2149, %v2237
        %v2239 = vpop.f32.mrf.mxu0
        %v2240 = vadd.f32 %v2151, %v2239
        %2241 = vmatmul.bf16.gmra.mxu0 %v1173
        %v2242 = vpop.f32.mrf.mxu0
        %v2243 = vadd.f32 %v2154, %v2242
        %v2244 = vpop.f32.mrf.mxu0
        %v2245 = vadd.f32 %v2156, %v2244
        %2246 = vmatmul.bf16.gmra.mxu0 %v1174
        %v2247 = vpop.f32.mrf.mxu0
        %v2248 = vadd.f32 %v2159, %v2247
        %v2249 = vpop.f32.mrf.mxu0
        %v2250 = vadd.f32 %v2161, %v2249
        %2251 = vmatmul.bf16.gmra.mxu0 %v1175
        %v2252 = vpop.f32.mrf.mxu0
        %v2253 = vadd.f32 %v2164, %v2252
        %v2254 = vpop.f32.mrf.mxu0
        %v2255 = vadd.f32 %v2166, %v2254
        %2256 = vmatmul.bf16.gmra.mxu0 %v1176
        %v2257 = vpop.f32.mrf.mxu0
        %v2258 = vadd.f32 %v2169, %v2257
        %v2259 = vpop.f32.mrf.mxu0
        %v2260 = vadd.f32 %v2171, %v2259
        %2261 = vmatmul.bf16.gmra.mxu0 %v1177
        %v2262 = vpop.f32.mrf.mxu0
        %v2263 = vadd.f32 %v2174, %v2262
        %v2264 = vpop.f32.mrf.mxu0
        %v2265 = vadd.f32 %v2176, %v2264
        %2266 = vmatmul.bf16.gmra.mxu0 %v1178
        %v2267 = vpop.f32.mrf.mxu0
        %v2268 = vadd.f32 %v2179, %v2267
        %v2269 = vpop.f32.mrf.mxu0
        %v2270 = vadd.f32 %v2181, %v2269
        %2271 = vmatmul.bf16.gmra.mxu0 %v1179
        %v2272 = vpop.f32.mrf.mxu0
        %v2273 = vadd.f32 %v2184, %v2272
        %v2274 = vpop.f32.mrf.mxu0
        %v2275 = vadd.f32 %v2186, %v2274
        %2276 = vmatmul.bf16.gmra.mxu0 %v1180
        %v2277 = vpop.f32.mrf.mxu0
        %v2278 = vadd.f32 %v2189, %v2277
        %v2279 = vpop.f32.mrf.mxu0
        %v2280 = vadd.f32 %v2191, %v2279
        %2281 = vmatmul.bf16.gmra.mxu0 %v1328
        %v2282 = vpop.f32.mrf.mxu0
        %v2283 = vadd.f32 %v2194, %v2282
        %v2284 = vpop.f32.mrf.mxu0
        %v2285 = vadd.f32 %v2196, %v2284
        %2286 = vdwg.mxu0
        %2287 = vmatpush.bf16.msra.mxu0 %v1826
        %2288 = vmatpush.bf16.msra.mxu0 %v1825
        %2289 = vmatpush.bf16.msra.mxu0 %v1824
        %2290 = vmatpush.bf16.msra.mxu0 %v1823
        %2291 = vmatpush.bf16.msra.mxu0 %v1822
        %2292 = vmatpush.bf16.msra.mxu0 %v1821
        %2293 = vmatpush.bf16.msra.mxu0 %v1820
        %2294 = vmatpush.bf16.msra.mxu0 %v1819
        %2295 = vmatmul.bf16.gmra.mxu0 %v1230
        %v2296 = vpop.f32.mrf.mxu0
        %v2297 = vadd.f32 %v2208, %v2296
        %v2298 = vpop.f32.mrf.mxu0
        %v2299 = vadd.f32 %v2210, %v2298
        %2300 = vmatmul.bf16.gmra.mxu0 %v1231
        %v2301 = vpop.f32.mrf.mxu0
        %v2302 = vadd.f32 %v2213, %v2301
        %v2303 = vpop.f32.mrf.mxu0
        %v2304 = vadd.f32 %v2215, %v2303
        %2305 = vmatmul.bf16.gmra.mxu0 %v1232
        %v2306 = vpop.f32.mrf.mxu0
        %v2307 = vadd.f32 %v2218, %v2306
        %v2308 = vpop.f32.mrf.mxu0
        %v2309 = vadd.f32 %v2220, %v2308
        %2310 = vmatmul.bf16.gmra.mxu0 %v1233
        %v2311 = vpop.f32.mrf.mxu0
        %v2312 = vadd.f32 %v2223, %v2311
        %v2313 = vpop.f32.mrf.mxu0
        %v2314 = vadd.f32 %v2225, %v2313
        %2315 = vmatmul.bf16.gmra.mxu0 %v1234
        %v2316 = vpop.f32.mrf.mxu0
        %v2317 = vadd.f32 %v2228, %v2316
        %v2318 = vpop.f32.mrf.mxu0
        %v2319 = vadd.f32 %v2230, %v2318
        %2320 = vmatmul.bf16.gmra.mxu0 %v1235
        %v2321 = vpop.f32.mrf.mxu0
        %v2322 = vadd.f32 %v2233, %v2321
        %v2323 = vpop.f32.mrf.mxu0
        %v2324 = vadd.f32 %v2235, %v2323
        %2325 = vmatmul.bf16.gmra.mxu0 %v1236
        %v2326 = vpop.f32.mrf.mxu0
        %v2327 = vadd.f32 %v2238, %v2326
        %v2328 = vpop.f32.mrf.mxu0
        %v2329 = vadd.f32 %v2240, %v2328
        %2330 = vmatmul.bf16.gmra.mxu0 %v1237
        %v2331 = vpop.f32.mrf.mxu0
        %v2332 = vadd.f32 %v2243, %v2331
        %v2333 = vpop.f32.mrf.mxu0
        %v2334 = vadd.f32 %v2245, %v2333
        %2335 = vmatmul.bf16.gmra.mxu0 %v1238
        %v2336 = vpop.f32.mrf.mxu0
        %v2337 = vadd.f32 %v2248, %v2336
        %v2338 = vpop.f32.mrf.mxu0
        %v2339 = vadd.f32 %v2250, %v2338
        %2340 = vmatmul.bf16.gmra.mxu0 %v1239
        %v2341 = vpop.f32.mrf.mxu0
        %v2342 = vadd.f32 %v2253, %v2341
        %v2343 = vpop.f32.mrf.mxu0
        %v2344 = vadd.f32 %v2255, %v2343
        %2345 = vmatmul.bf16.gmra.mxu0 %v1240
        %v2346 = vpop.f32.mrf.mxu0
        %v2347 = vadd.f32 %v2258, %v2346
        %v2348 = vpop.f32.mrf.mxu0
        %v2349 = vadd.f32 %v2260, %v2348
        %2350 = vmatmul.bf16.gmra.mxu0 %v1241
        %v2351 = vpop.f32.mrf.mxu0
        %v2352 = vadd.f32 %v2263, %v2351
        %v2353 = vpop.f32.mrf.mxu0
        %v2354 = vadd.f32 %v2265, %v2353
        %2355 = vmatmul.bf16.gmra.mxu0 %v1242
        %v2356 = vpop.f32.mrf.mxu0
        %v2357 = vadd.f32 %v2268, %v2356
        %v2358 = vpop.f32.mrf.mxu0
        %v2359 = vadd.f32 %v2270, %v2358
        %2360 = vmatmul.bf16.gmra.mxu0 %v1243
        %v2361 = vpop.f32.mrf.mxu0
        %v2362 = vadd.f32 %v2273, %v2361
        %v2363 = vpop.f32.mrf.mxu0
        %v2364 = vadd.f32 %v2275, %v2363
        %2365 = vmatmul.bf16.gmra.mxu0 %v1244
        %v2366 = vpop.f32.mrf.mxu0
        %v2367 = vadd.f32 %v2278, %v2366
        %v2368 = vpop.f32.mrf.mxu0
        %v2369 = vadd.f32 %v2280, %v2368
        %2370 = vmatmul.bf16.gmra.mxu0 %v1332
        %v2371 = vpop.f32.mrf.mxu0
        %v2372 = vadd.f32 %v2283, %v2371
        %v2373 = vpop.f32.mrf.mxu0
        %v2374 = vadd.f32 %v2285, %v2373
        %2375 = vdwg.mxu0
        %2376 = vmatpush.bf16.msra.mxu0 %v1834
        %2377 = vmatpush.bf16.msra.mxu0 %v1833
        %2378 = vmatpush.bf16.msra.mxu0 %v1832
        %2379 = vmatpush.bf16.msra.mxu0 %v1831
        %2380 = vmatpush.bf16.msra.mxu0 %v1830
        %2381 = vmatpush.bf16.msra.mxu0 %v1829
        %2382 = vmatpush.bf16.msra.mxu0 %v1828
        %2383 = vmatpush.bf16.msra.mxu0 %v1827
        %2384 = vmatmul.bf16.gmra.mxu0 %v1294
        %v2385 = vpop.f32.mrf.mxu0
        %v2386 = vadd.f32 %v2297, %v2385
        %v2387 = vpop.f32.mrf.mxu0
        %v2388 = vadd.f32 %v2299, %v2387
        %2389 = vmatmul.bf16.gmra.mxu0 %v1295
        %v2390 = vpop.f32.mrf.mxu0
        %v2391 = vadd.f32 %v2302, %v2390
        %v2392 = vpop.f32.mrf.mxu0
        %v2393 = vadd.f32 %v2304, %v2392
        %2394 = vmatmul.bf16.gmra.mxu0 %v1296
        %v2395 = vpop.f32.mrf.mxu0
        %v2396 = vadd.f32 %v2307, %v2395
        %v2397 = vpop.f32.mrf.mxu0
        %v2398 = vadd.f32 %v2309, %v2397
        %2399 = vmatmul.bf16.gmra.mxu0 %v1297
        %v2400 = vpop.f32.mrf.mxu0
        %v2401 = vadd.f32 %v2312, %v2400
        %v2402 = vpop.f32.mrf.mxu0
        %v2403 = vadd.f32 %v2314, %v2402
        %2404 = vmatmul.bf16.gmra.mxu0 %v1298
        %v2405 = vpop.f32.mrf.mxu0
        %v2406 = vadd.f32 %v2317, %v2405
        %v2407 = vpop.f32.mrf.mxu0
        %v2408 = vadd.f32 %v2319, %v2407
        %2409 = vmatmul.bf16.gmra.mxu0 %v1299
        %v2410 = vpop.f32.mrf.mxu0
        %v2411 = vadd.f32 %v2322, %v2410
        %v2412 = vpop.f32.mrf.mxu0
        %v2413 = vadd.f32 %v2324, %v2412
        %2414 = vmatmul.bf16.gmra.mxu0 %v1300
        %v2415 = vpop.f32.mrf.mxu0
        %v2416 = vadd.f32 %v2327, %v2415
        %v2417 = vpop.f32.mrf.mxu0
        %v2418 = vadd.f32 %v2329, %v2417
        %2419 = vmatmul.bf16.gmra.mxu0 %v1301
        %v2420 = vpop.f32.mrf.mxu0
        %v2421 = vadd.f32 %v2332, %v2420
        %v2422 = vpop.f32.mrf.mxu0
        %v2423 = vadd.f32 %v2334, %v2422
        %2424 = vmatmul.bf16.gmra.mxu0 %v1302
        %v2425 = vpop.f32.mrf.mxu0
        %v2426 = vadd.f32 %v2337, %v2425
        %v2427 = vpop.f32.mrf.mxu0
        %v2428 = vadd.f32 %v2339, %v2427
        %2429 = vmatmul.bf16.gmra.mxu0 %v1303
        %v2430 = vpop.f32.mrf.mxu0
        %v2431 = vadd.f32 %v2342, %v2430
        %v2432 = vpop.f32.mrf.mxu0
        %v2433 = vadd.f32 %v2344, %v2432
        %2434 = vmatmul.bf16.gmra.mxu0 %v1304
        %v2435 = vpop.f32.mrf.mxu0
        %v2436 = vadd.f32 %v2347, %v2435
        %v2437 = vpop.f32.mrf.mxu0
        %v2438 = vadd.f32 %v2349, %v2437
        %2439 = vmatmul.bf16.gmra.mxu0 %v1305
        %v2440 = vpop.f32.mrf.mxu0
        %v2441 = vadd.f32 %v2352, %v2440
        %v2442 = vpop.f32.mrf.mxu0
        %v2443 = vadd.f32 %v2354, %v2442
        %2444 = vmatmul.bf16.gmra.mxu0 %v1306
        %v2445 = vpop.f32.mrf.mxu0
        %v2446 = vadd.f32 %v2357, %v2445
        %v2447 = vpop.f32.mrf.mxu0
        %v2448 = vadd.f32 %v2359, %v2447
        %2449 = vmatmul.bf16.gmra.mxu0 %v1307
        %v2450 = vpop.f32.mrf.mxu0
        %v2451 = vadd.f32 %v2362, %v2450
        %v2452 = vpop.f32.mrf.mxu0
        %v2453 = vadd.f32 %v2364, %v2452
        %2454 = vmatmul.bf16.gmra.mxu0 %v1308
        %v2455 = vpop.f32.mrf.mxu0
        %v2456 = vadd.f32 %v2367, %v2455
        %v2457 = vpop.f32.mrf.mxu0
        %v2458 = vadd.f32 %v2369, %v2457
        %2459 = vmatmul.bf16.gmra.mxu0 %v1336
        %v2460 = vpop.f32.mrf.mxu0
        %v2461 = vadd.f32 %v2372, %v2460
        %v2462 = vpop.f32.mrf.mxu0
        %v2463 = vadd.f32 %v2374, %v2462
        %2464 = vdwg.mxu0
        %2465 = vmatpush.bf16.msra.mxu0 %v1842
        %2466 = vmatpush.bf16.msra.mxu0 %v1841
        %2467 = vmatpush.bf16.msra.mxu0 %v1840
        %2468 = vmatpush.bf16.msra.mxu0 %v1839
        %2469 = vmatpush.bf16.msra.mxu0 %v1838
        %2470 = vmatpush.bf16.msra.mxu0 %v1837
        %2471 = vmatpush.bf16.msra.mxu0 %v1836
        %2472 = vmatpush.bf16.msra.mxu0 %v1835
        %2473 = vmatmul.bf16.gmra.mxu0 %v1167
        %v2474 = vpop.f32.mrf.mxu0
        %v2475 = vadd.f32 %v2386, %v2474
        %v2476 = vpop.f32.mrf.mxu0
        %v2477 = vadd.f32 %v2388, %v2476
        %2478 = vmatmul.bf16.gmra.mxu0 %v1168
        %v2479 = vpop.f32.mrf.mxu0
        %v2480 = vadd.f32 %v2391, %v2479
        %v2481 = vpop.f32.mrf.mxu0
        %v2482 = vadd.f32 %v2393, %v2481
        %2483 = vmatmul.bf16.gmra.mxu0 %v1169
        %v2484 = vpop.f32.mrf.mxu0
        %v2485 = vadd.f32 %v2396, %v2484
        %v2486 = vpop.f32.mrf.mxu0
        %v2487 = vadd.f32 %v2398, %v2486
        %2488 = vmatmul.bf16.gmra.mxu0 %v1170
        %v2489 = vpop.f32.mrf.mxu0
        %v2490 = vadd.f32 %v2401, %v2489
        %v2491 = vpop.f32.mrf.mxu0
        %v2492 = vadd.f32 %v2403, %v2491
        %2493 = vmatmul.bf16.gmra.mxu0 %v1171
        %v2494 = vpop.f32.mrf.mxu0
        %v2495 = vadd.f32 %v2406, %v2494
        %v2496 = vpop.f32.mrf.mxu0
        %v2497 = vadd.f32 %v2408, %v2496
        %2498 = vmatmul.bf16.gmra.mxu0 %v1172
        %v2499 = vpop.f32.mrf.mxu0
        %v2500 = vadd.f32 %v2411, %v2499
        %v2501 = vpop.f32.mrf.mxu0
        %v2502 = vadd.f32 %v2413, %v2501
        %2503 = vmatmul.bf16.gmra.mxu0 %v1173
        %v2504 = vpop.f32.mrf.mxu0
        %v2505 = vadd.f32 %v2416, %v2504
        %v2506 = vpop.f32.mrf.mxu0
        %v2507 = vadd.f32 %v2418, %v2506
        %2508 = vmatmul.bf16.gmra.mxu0 %v1174
        %v2509 = vpop.f32.mrf.mxu0
        %v2510 = vadd.f32 %v2421, %v2509
        %v2511 = vpop.f32.mrf.mxu0
        %v2512 = vadd.f32 %v2423, %v2511
        %2513 = vmatmul.bf16.gmra.mxu0 %v1175
        %v2514 = vpop.f32.mrf.mxu0
        %v2515 = vadd.f32 %v2426, %v2514
        %v2516 = vpop.f32.mrf.mxu0
        %v2517 = vadd.f32 %v2428, %v2516
        %2518 = vmatmul.bf16.gmra.mxu0 %v1176
        %v2519 = vpop.f32.mrf.mxu0
        %v2520 = vadd.f32 %v2431, %v2519
        %v2521 = vpop.f32.mrf.mxu0
        %v2522 = vadd.f32 %v2433, %v2521
        %2523 = vmatmul.bf16.gmra.mxu0 %v1177
        %v2524 = vpop.f32.mrf.mxu0
        %v2525 = vadd.f32 %v2436, %v2524
        %v2526 = vpop.f32.mrf.mxu0
        %v2527 = vadd.f32 %v2438, %v2526
        %2528 = vmatmul.bf16.gmra.mxu0 %v1178
        %v2529 = vpop.f32.mrf.mxu0
        %v2530 = vadd.f32 %v2441, %v2529
        %v2531 = vpop.f32.mrf.mxu0
        %v2532 = vadd.f32 %v2443, %v2531
        %2533 = vmatmul.bf16.gmra.mxu0 %v1179
        %v2534 = vpop.f32.mrf.mxu0
        %v2535 = vadd.f32 %v2446, %v2534
        %v2536 = vpop.f32.mrf.mxu0
        %v2537 = vadd.f32 %v2448, %v2536
        %2538 = vmatmul.bf16.gmra.mxu0 %v1180
        %v2539 = vpop.f32.mrf.mxu0
        %v2540 = vadd.f32 %v2451, %v2539
        %v2541 = vpop.f32.mrf.mxu0
        %v2542 = vadd.f32 %v2453, %v2541
        %2543 = vmatmul.bf16.gmra.mxu0 %v1328
        %v2544 = vpop.f32.mrf.mxu0
        %v2545 = vadd.f32 %v2456, %v2544
        %v2546 = vpop.f32.mrf.mxu0
        %v2547 = vadd.f32 %v2458, %v2546
        %2548 = vmatmul.bf16.gmra.mxu0 %v1341
        %v2549 = vpop.f32.mrf.mxu0
        %v2550 = vadd.f32 %v2461, %v2549
        %v2551 = vpop.f32.mrf.mxu0
        %v2552 = vadd.f32 %v2463, %v2551
        %2553 = vdwg.mxu0
        %2554 = vmatpush.bf16.msra.mxu0 %v1850
        %2555 = vmatpush.bf16.msra.mxu0 %v1849
        %2556 = vmatpush.bf16.msra.mxu0 %v1848
        %2557 = vmatpush.bf16.msra.mxu0 %v1847
        %2558 = vmatpush.bf16.msra.mxu0 %v1846
        %2559 = vmatpush.bf16.msra.mxu0 %v1845
        %2560 = vmatpush.bf16.msra.mxu0 %v1844
        %2561 = vmatpush.bf16.msra.mxu0 %v1843
        %2562 = vmatmul.bf16.gmra.mxu0 %v1231
        %v2563 = vpop.f32.mrf.mxu0
        %v2564 = vadd.f32 %v2475, %v2563
        %v2565 = vpop.f32.mrf.mxu0
        %v2566 = vadd.f32 %v2477, %v2565
        %2567 = vmatmul.bf16.gmra.mxu0 %v1232
        %v2568 = vpop.f32.mrf.mxu0
        %v2569 = vadd.f32 %v2480, %v2568
        %v2570 = vpop.f32.mrf.mxu0
        %v2571 = vadd.f32 %v2482, %v2570
        %2572 = vmatmul.bf16.gmra.mxu0 %v1233
        %v2573 = vpop.f32.mrf.mxu0
        %v2574 = vadd.f32 %v2485, %v2573
        %v2575 = vpop.f32.mrf.mxu0
        %v2576 = vadd.f32 %v2487, %v2575
        %2577 = vmatmul.bf16.gmra.mxu0 %v1234
        %v2578 = vpop.f32.mrf.mxu0
        %v2579 = vadd.f32 %v2490, %v2578
        %v2580 = vpop.f32.mrf.mxu0
        %v2581 = vadd.f32 %v2492, %v2580
        %2582 = vmatmul.bf16.gmra.mxu0 %v1235
        %v2583 = vpop.f32.mrf.mxu0
        %v2584 = vadd.f32 %v2495, %v2583
        %v2585 = vpop.f32.mrf.mxu0
        %v2586 = vadd.f32 %v2497, %v2585
        %2587 = vmatmul.bf16.gmra.mxu0 %v1236
        %v2588 = vpop.f32.mrf.mxu0
        %v2589 = vadd.f32 %v2500, %v2588
        %v2590 = vpop.f32.mrf.mxu0
        %v2591 = vadd.f32 %v2502, %v2590
        %2592 = vmatmul.bf16.gmra.mxu0 %v1237
        %v2593 = vpop.f32.mrf.mxu0
        %v2594 = vadd.f32 %v2505, %v2593
        %v2595 = vpop.f32.mrf.mxu0
        %v2596 = vadd.f32 %v2507, %v2595
        %2597 = vmatmul.bf16.gmra.mxu0 %v1238
        %v2598 = vpop.f32.mrf.mxu0
        %v2599 = vadd.f32 %v2510, %v2598
        %v2600 = vpop.f32.mrf.mxu0
        %v2601 = vadd.f32 %v2512, %v2600
        %2602 = vmatmul.bf16.gmra.mxu0 %v1239
        %v2603 = vpop.f32.mrf.mxu0
        %v2604 = vadd.f32 %v2515, %v2603
        %v2605 = vpop.f32.mrf.mxu0
        %v2606 = vadd.f32 %v2517, %v2605
        %2607 = vmatmul.bf16.gmra.mxu0 %v1240
        %v2608 = vpop.f32.mrf.mxu0
        %v2609 = vadd.f32 %v2520, %v2608
        %v2610 = vpop.f32.mrf.mxu0
        %v2611 = vadd.f32 %v2522, %v2610
        %2612 = vmatmul.bf16.gmra.mxu0 %v1241
        %v2613 = vpop.f32.mrf.mxu0
        %v2614 = vadd.f32 %v2525, %v2613
        %v2615 = vpop.f32.mrf.mxu0
        %v2616 = vadd.f32 %v2527, %v2615
        %2617 = vmatmul.bf16.gmra.mxu0 %v1242
        %v2618 = vpop.f32.mrf.mxu0
        %v2619 = vadd.f32 %v2530, %v2618
        %v2620 = vpop.f32.mrf.mxu0
        %v2621 = vadd.f32 %v2532, %v2620
        %2622 = vmatmul.bf16.gmra.mxu0 %v1243
        %v2623 = vpop.f32.mrf.mxu0
        %v2624 = vadd.f32 %v2535, %v2623
        %v2625 = vpop.f32.mrf.mxu0
        %v2626 = vadd.f32 %v2537, %v2625
        %2627 = vmatmul.bf16.gmra.mxu0 %v1244
        %v2628 = vpop.f32.mrf.mxu0
        %v2629 = vadd.f32 %v2540, %v2628
        %v2630 = vpop.f32.mrf.mxu0
        %v2631 = vadd.f32 %v2542, %v2630
        %2632 = vmatmul.bf16.gmra.mxu0 %v1332
        %v2633 = vpop.f32.mrf.mxu0
        %v2634 = vadd.f32 %v2545, %v2633
        %v2635 = vpop.f32.mrf.mxu0
        %v2636 = vadd.f32 %v2547, %v2635
        %2637 = vmatmul.bf16.gmra.mxu0 %v1345
        %v2638 = vpop.f32.mrf.mxu0
        %v2639 = vadd.f32 %v2550, %v2638
        %v2640 = vpop.f32.mrf.mxu0
        %v2641 = vadd.f32 %v2552, %v2640
        %2642 = vdwg.mxu0
        %2643 = vmatpush.bf16.msra.mxu0 %v1858
        %2644 = vmatpush.bf16.msra.mxu0 %v1857
        %2645 = vmatpush.bf16.msra.mxu0 %v1856
        %2646 = vmatpush.bf16.msra.mxu0 %v1855
        %2647 = vmatpush.bf16.msra.mxu0 %v1854
        %2648 = vmatpush.bf16.msra.mxu0 %v1853
        %2649 = vmatpush.bf16.msra.mxu0 %v1852
        %2650 = vmatpush.bf16.msra.mxu0 %v1851
        %2651 = vmatmul.bf16.gmra.mxu0 %v1295
        %v2652 = vpop.f32.mrf.mxu0
        %v2653 = vadd.f32 %v2564, %v2652
        %v2654 = vpop.f32.mrf.mxu0
        %v2655 = vadd.f32 %v2566, %v2654
        %2656 = vmatmul.bf16.gmra.mxu0 %v1296
        %v2657 = vpop.f32.mrf.mxu0
        %v2658 = vadd.f32 %v2569, %v2657
        %v2659 = vpop.f32.mrf.mxu0
        %v2660 = vadd.f32 %v2571, %v2659
        %2661 = vmatmul.bf16.gmra.mxu0 %v1297
        %v2662 = vpop.f32.mrf.mxu0
        %v2663 = vadd.f32 %v2574, %v2662
        %v2664 = vpop.f32.mrf.mxu0
        %v2665 = vadd.f32 %v2576, %v2664
        %2666 = vmatmul.bf16.gmra.mxu0 %v1298
        %v2667 = vpop.f32.mrf.mxu0
        %v2668 = vadd.f32 %v2579, %v2667
        %v2669 = vpop.f32.mrf.mxu0
        %v2670 = vadd.f32 %v2581, %v2669
        %2671 = vmatmul.bf16.gmra.mxu0 %v1299
        %v2672 = vpop.f32.mrf.mxu0
        %v2673 = vadd.f32 %v2584, %v2672
        %v2674 = vpop.f32.mrf.mxu0
        %v2675 = vadd.f32 %v2586, %v2674
        %2676 = vmatmul.bf16.gmra.mxu0 %v1300
        %v2677 = vpop.f32.mrf.mxu0
        %v2678 = vadd.f32 %v2589, %v2677
        %v2679 = vpop.f32.mrf.mxu0
        %v2680 = vadd.f32 %v2591, %v2679
        %2681 = vmatmul.bf16.gmra.mxu0 %v1301
        %v2682 = vpop.f32.mrf.mxu0
        %v2683 = vadd.f32 %v2594, %v2682
        %v2684 = vpop.f32.mrf.mxu0
        %v2685 = vadd.f32 %v2596, %v2684
        %2686 = vmatmul.bf16.gmra.mxu0 %v1302
        %v2687 = vpop.f32.mrf.mxu0
        %v2688 = vadd.f32 %v2599, %v2687
        %v2689 = vpop.f32.mrf.mxu0
        %v2690 = vadd.f32 %v2601, %v2689
        %2691 = vmatmul.bf16.gmra.mxu0 %v1303
        %v2692 = vpop.f32.mrf.mxu0
        %v2693 = vadd.f32 %v2604, %v2692
        %v2694 = vpop.f32.mrf.mxu0
        %v2695 = vadd.f32 %v2606, %v2694
        %2696 = vmatmul.bf16.gmra.mxu0 %v1304
        %v2697 = vpop.f32.mrf.mxu0
        %v2698 = vadd.f32 %v2609, %v2697
        %v2699 = vpop.f32.mrf.mxu0
        %v2700 = vadd.f32 %v2611, %v2699
        %2701 = vmatmul.bf16.gmra.mxu0 %v1305
        %v2702 = vpop.f32.mrf.mxu0
        %v2703 = vadd.f32 %v2614, %v2702
        %v2704 = vpop.f32.mrf.mxu0
        %v2705 = vadd.f32 %v2616, %v2704
        %2706 = vmatmul.bf16.gmra.mxu0 %v1306
        %v2707 = vpop.f32.mrf.mxu0
        %v2708 = vadd.f32 %v2619, %v2707
        %v2709 = vpop.f32.mrf.mxu0
        %v2710 = vadd.f32 %v2621, %v2709
        %2711 = vmatmul.bf16.gmra.mxu0 %v1307
        %v2712 = vpop.f32.mrf.mxu0
        %v2713 = vadd.f32 %v2624, %v2712
        %v2714 = vpop.f32.mrf.mxu0
        %v2715 = vadd.f32 %v2626, %v2714
        %2716 = vmatmul.bf16.gmra.mxu0 %v1308
        %v2717 = vpop.f32.mrf.mxu0
        %v2718 = vadd.f32 %v2629, %v2717
        %v2719 = vpop.f32.mrf.mxu0
        %v2720 = vadd.f32 %v2631, %v2719
        %2721 = vmatmul.bf16.gmra.mxu0 %v1336
        %v2722 = vpop.f32.mrf.mxu0
        %v2723 = vadd.f32 %v2634, %v2722
        %v2724 = vpop.f32.mrf.mxu0
        %v2725 = vadd.f32 %v2636, %v2724
        %2726 = vmatmul.bf16.gmra.mxu0 %v1349
        %v2727 = vpop.f32.mrf.mxu0
        %v2728 = vadd.f32 %v2639, %v2727
        %v2729 = vpop.f32.mrf.mxu0
        %v2730 = vadd.f32 %v2641, %v2729
        %2731 = vdwg.mxu0
        %v2732 = vadd.f32 %v2653, %v2655
        %v2733 = vadd.f32 %v2732, %v2658
        %v2734 = vadd.f32 %v2733, %v2660
        %v2735 = vadd.f32 %v2734, %v2663
        %v2736 = vadd.f32 %v2735, %v2665
        %v2737 = vadd.f32 %v2736, %v2668
        %v2738 = vadd.f32 %v2737, %v2670
        %v2739 = vadd.f32 %v2738, %v2673
        %v2740 = vadd.f32 %v2739, %v2675
        %v2741 = vadd.f32 %v2740, %v2678
        %v2742 = vadd.f32 %v2741, %v2680
        %v2743 = vadd.f32 %v2742, %v2683
        %v2744 = vadd.f32 %v2743, %v2685
        %v2745 = vadd.f32 %v2744, %v2688
        %v2746 = vadd.f32 %v2745, %v2690
        %v2747 = vadd.f32 %v2746, %v2693
        %v2748 = vadd.f32 %v2747, %v2695
        %v2749 = vadd.f32 %v2748, %v2698
        %v2750 = vadd.f32 %v2749, %v2700
        %v2751 = vadd.f32 %v2750, %v2703
        %v2752 = vadd.f32 %v2751, %v2705
        %v2753 = vadd.f32 %v2752, %v2708
        %v2754 = vadd.f32 %v2753, %v2710
        %v2755 = vadd.f32 %v2754, %v2713
        %v2756 = vadd.f32 %v2755, %v2715
        %v2757 = vadd.f32 %v2756, %v2718
        %v2758 = vadd.f32 %v2757, %v2720
        %v2759 = vadd.f32 %v2758, %v2723
        %v2760 = vadd.f32 %v2759, %v2725
        %v2761 = vadd.f32 %v2760, %v2728
        %v2762 = vadd.f32 %v2761, %v2730
        %v2763 = vrot.slane %v2762, 4
        %v2764 = vadd.f32 %v2762, %v2763
        %v2765 = vrot.slane %v2764, 2
        %v2766 = vadd.f32 %v2764, %v2765
        %v2767 = vrot.slane %v2766, 1
        %v2768 = vadd.f32 %v2766, %v2767
        %v2769 = vld [vmem:[%s2] sm:$0xff]
        %v2770 = vld [vmem:[%s2 + $0x8] sm:$0xff]
        %v2771 = vld [vmem:[%s2 + $0x10] sm:$0xff]
        %v2772 = vld [vmem:[%s2 + $0x18] sm:$0xff]
        %v2773 = vld [vmem:[%s2 + $0x20] sm:$0xff]
        %v2774 = vld [vmem:[%s2 + $0x28] sm:$0xff]
        %v2775 = vld [vmem:[%s2 + $0x30] sm:$0xff]
        %v2776 = vld [vmem:[%s2 + $0x38] sm:$0xff]
        %v2777 = vld [vmem:[%s2 + $0x40] sm:$0xff]
        %v2778 = vld [vmem:[%s2 + $0x48] sm:$0xff]
        %v2779 = vld [vmem:[%s2 + $0x50] sm:$0xff]
        %v2780 = vld [vmem:[%s2 + $0x58] sm:$0xff]
        %v2781 = vld [vmem:[%s2 + $0x60] sm:$0xff]
        %v2782 = vld [vmem:[%s2 + $0x68] sm:$0xff]
        %v2783 = vld [vmem:[%s2 + $0x70] sm:$0xff]
        %v2784 = vld [vmem:[%s2 + $0x78] sm:$0xff]
        %2785 = vmatpush.msra.mxu0 %v2784
        %2786 = vmatpush.msra.mxu0 %v2783
        %2787 = vmatpush.msra.mxu0 %v2782
        %2788 = vmatpush.msra.mxu0 %v2781
        %2789 = vmatpush.msra.mxu0 %v2780
        %2790 = vmatpush.msra.mxu0 %v2779
        %2791 = vmatpush.msra.mxu0 %v2778
        %2792 = vmatpush.msra.mxu0 %v2777
        %2793 = vmatpush.msra.mxu0 %v2776
        %2794 = vmatpush.msra.mxu0 %v2775
        %2795 = vmatpush.msra.mxu0 %v2774
        %2796 = vmatpush.msra.mxu0 %v2773
        %2797 = vmatpush.msra.mxu0 %v2772
        %2798 = vmatpush.msra.mxu0 %v2771
        %2799 = vmatpush.msra.mxu0 %v2770
        %2800 = vmatpush.msra.mxu0 %v2769
        %2801 = vmatmul.f32.gmra.mxu0 %v2768
        %v2802 = vpop.f32.mrf.mxu0
        %v2803 = vadd.f32 0.0, %v2802
        %2804 = vdwg.mxu0
        %v2805 = vrcp.pop 4096.0
        %v2806 = vmul.f32 4096.0, %v2805
        %v2807 = vsub.f32 1.0, %v2806
        %v2808 = vmul.f32 %v2805, %v2807
        %v2809 = vadd.f32 %v2805, %v2808
        %vm2810 = vweird.f32 %v2805
        %v2811 = vsel %vm2810, %v2805, %v2809
        %v2812 = vmul.f32 %v2803, %v2811
        %v2813 = vperm.slane %v2812, 0
        %v2814 = vsub.f32 %v2653, %v2813
        %v2815 = vsub.f32 %v2655, %v2813
        %v2816 = vsub.f32 %v2658, %v2813
        %v2817 = vsub.f32 %v2660, %v2813
        %v2818 = vsub.f32 %v2663, %v2813
        %v2819 = vsub.f32 %v2665, %v2813
        %v2820 = vsub.f32 %v2668, %v2813
        %v2821 = vsub.f32 %v2670, %v2813
        %v2822 = vsub.f32 %v2673, %v2813
        %v2823 = vsub.f32 %v2675, %v2813
        %v2824 = vsub.f32 %v2678, %v2813
        %v2825 = vsub.f32 %v2680, %v2813
        %v2826 = vsub.f32 %v2683, %v2813
        %v2827 = vsub.f32 %v2685, %v2813
        %v2828 = vsub.f32 %v2688, %v2813
        %v2829 = vsub.f32 %v2690, %v2813
        %v2830 = vsub.f32 %v2693, %v2813
        %v2831 = vsub.f32 %v2695, %v2813
        %v2832 = vsub.f32 %v2698, %v2813
        %v2833 = vsub.f32 %v2700, %v2813
        %v2834 = vsub.f32 %v2703, %v2813
        %v2835 = vsub.f32 %v2705, %v2813
        %v2836 = vsub.f32 %v2708, %v2813
        %v2837 = vsub.f32 %v2710, %v2813
        %v2838 = vsub.f32 %v2713, %v2813
        %v2839 = vsub.f32 %v2715, %v2813
        %v2840 = vsub.f32 %v2718, %v2813
        %v2841 = vsub.f32 %v2720, %v2813
        %v2842 = vsub.f32 %v2723, %v2813
        %v2843 = vsub.f32 %v2725, %v2813
        %v2844 = vsub.f32 %v2728, %v2813
        %v2845 = vsub.f32 %v2730, %v2813
        %v2846 = vmul.f32 %v2814, %v2814
        %v2847 = vmul.f32 %v2815, %v2815
        %v2848 = vmul.f32 %v2816, %v2816
        %v2849 = vmul.f32 %v2817, %v2817
        %v2850 = vmul.f32 %v2818, %v2818
        %v2851 = vmul.f32 %v2819, %v2819
        %v2852 = vmul.f32 %v2820, %v2820
        %v2853 = vmul.f32 %v2821, %v2821
        %v2854 = vmul.f32 %v2822, %v2822
        %v2855 = vmul.f32 %v2823, %v2823
        %v2856 = vmul.f32 %v2824, %v2824
        %v2857 = vmul.f32 %v2825, %v2825
        %v2858 = vmul.f32 %v2826, %v2826
        %v2859 = vmul.f32 %v2827, %v2827
        %v2860 = vmul.f32 %v2828, %v2828
        %v2861 = vmul.f32 %v2829, %v2829
        %v2862 = vmul.f32 %v2830, %v2830
        %v2863 = vmul.f32 %v2831, %v2831
        %v2864 = vmul.f32 %v2832, %v2832
        %v2865 = vmul.f32 %v2833, %v2833
        %v2866 = vmul.f32 %v2834, %v2834
        %v2867 = vmul.f32 %v2835, %v2835
        %v2868 = vmul.f32 %v2836, %v2836
        %v2869 = vmul.f32 %v2837, %v2837
        %v2870 = vmul.f32 %v2838, %v2838
        %v2871 = vmul.f32 %v2839, %v2839
        %v2872 = vmul.f32 %v2840, %v2840
        %v2873 = vmul.f32 %v2841, %v2841
        %v2874 = vmul.f32 %v2842, %v2842
        %v2875 = vmul.f32 %v2843, %v2843
        %v2876 = vmul.f32 %v2844, %v2844
        %v2877 = vmul.f32 %v2845, %v2845
        %v2878 = vadd.f32 %v2846, %v2847
        %v2879 = vadd.f32 %v2878, %v2848
        %v2880 = vadd.f32 %v2879, %v2849
        %v2881 = vadd.f32 %v2880, %v2850
        %v2882 = vadd.f32 %v2881, %v2851
        %v2883 = vadd.f32 %v2882, %v2852
        %v2884 = vadd.f32 %v2883, %v2853
        %v2885 = vadd.f32 %v2884, %v2854
        %v2886 = vadd.f32 %v2885, %v2855
        %v2887 = vadd.f32 %v2886, %v2856
        %v2888 = vadd.f32 %v2887, %v2857
        %v2889 = vadd.f32 %v2888, %v2858
        %v2890 = vadd.f32 %v2889, %v2859
        %v2891 = vadd.f32 %v2890, %v2860
        %v2892 = vadd.f32 %v2891, %v2861
        %v2893 = vadd.f32 %v2892, %v2862
        %v2894 = vadd.f32 %v2893, %v2863
        %v2895 = vadd.f32 %v2894, %v2864
        %v2896 = vadd.f32 %v2895, %v2865
        %v2897 = vadd.f32 %v2896, %v2866
        %v2898 = vadd.f32 %v2897, %v2867
        %v2899 = vadd.f32 %v2898, %v2868
        %v2900 = vadd.f32 %v2899, %v2869
        %v2901 = vadd.f32 %v2900, %v2870
        %v2902 = vadd.f32 %v2901, %v2871
        %v2903 = vadd.f32 %v2902, %v2872
        %v2904 = vadd.f32 %v2903, %v2873
        %v2905 = vadd.f32 %v2904, %v2874
        %v2906 = vadd.f32 %v2905, %v2875
        %v2907 = vadd.f32 %v2906, %v2876
        %v2908 = vadd.f32 %v2907, %v2877
        %v2909 = vrot.slane %v2908, 4
        %v2910 = vadd.f32 %v2908, %v2909
        %v2911 = vrot.slane %v2910, 2
        %v2912 = vadd.f32 %v2910, %v2911
        %v2913 = vrot.slane %v2912, 1
        %v2914 = vadd.f32 %v2912, %v2913
        %2915 = vmatpush.msra.mxu0 %v2784
        %2916 = vmatpush.msra.mxu0 %v2783
        %2917 = vmatpush.msra.mxu0 %v2782
        %2918 = vmatpush.msra.mxu0 %v2781
        %2919 = vmatpush.msra.mxu0 %v2780
        %2920 = vmatpush.msra.mxu0 %v2779
        %2921 = vmatpush.msra.mxu0 %v2778
        %2922 = vmatpush.msra.mxu0 %v2777
        %2923 = vmatpush.msra.mxu0 %v2776
        %2924 = vmatpush.msra.mxu0 %v2775
        %2925 = vmatpush.msra.mxu0 %v2774
        %2926 = vmatpush.msra.mxu0 %v2773
        %2927 = vmatpush.msra.mxu0 %v2772
        %2928 = vmatpush.msra.mxu0 %v2771
        %2929 = vmatpush.msra.mxu0 %v2770
        %2930 = vmatpush.msra.mxu0 %v2769
        %2931 = vmatmul.f32.gmra.mxu0 %v2914
        %v2932 = vpop.f32.mrf.mxu0
        %v2933 = vadd.f32 0.0, %v2932
        %2934 = vdwg.mxu0
        %v2935 = vmul.f32 %v2933, %v2811
        %v2936 = vadd.f32 %v2935, 1e-05
        %v2937 = vrsqrt.pop %v2936
        %v2938 = vmul.f32 %v2937, %v2936
        %v2939 = vmul.f32 %v2938, %v2937
        %v2940 = vmul.f32 0.5, %v2939
        %v2941 = vsub.f32 1.5, %v2940
        %v2942 = vmul.f32 %v2937, %v2941
        %vm2943 = vweird.f32 %v2936
        %vm2944 = vweird.f32 %v2937
        %vm2945 = vmor %vm2943, %vm2944
        %v2946 = vsel %vm2945, %v2937, %v2942
        %v2947 = vperm.slane %v2946, 0
        %v2948 = vmul.f32 %v2814, %v2947
        %v2949 = vmul.f32 %v2815, %v2947
        %v2950 = vmul.f32 %v2816, %v2947
        %v2951 = vmul.f32 %v2817, %v2947
        %v2952 = vmul.f32 %v2818, %v2947
        %v2953 = vmul.f32 %v2819, %v2947
        %v2954 = vmul.f32 %v2820, %v2947
        %v2955 = vmul.f32 %v2821, %v2947
        %v2956 = vmul.f32 %v2822, %v2947
        %v2957 = vmul.f32 %v2823, %v2947
        %v2958 = vmul.f32 %v2824, %v2947
        %v2959 = vmul.f32 %v2825, %v2947
        %v2960 = vmul.f32 %v2826, %v2947
        %v2961 = vmul.f32 %v2827, %v2947
        %v2962 = vmul.f32 %v2828, %v2947
        %v2963 = vmul.f32 %v2829, %v2947
        %v2964 = vmul.f32 %v2830, %v2947
        %v2965 = vmul.f32 %v2831, %v2947
        %v2966 = vmul.f32 %v2832, %v2947
        %v2967 = vmul.f32 %v2833, %v2947
        %v2968 = vmul.f32 %v2834, %v2947
        %v2969 = vmul.f32 %v2835, %v2947
        %v2970 = vmul.f32 %v2836, %v2947
        %v2971 = vmul.f32 %v2837, %v2947
        %v2972 = vmul.f32 %v2838, %v2947
        %v2973 = vmul.f32 %v2839, %v2947
        %v2974 = vmul.f32 %v2840, %v2947
        %v2975 = vmul.f32 %v2841, %v2947
        %v2976 = vmul.f32 %v2842, %v2947
        %v2977 = vmul.f32 %v2843, %v2947
        %v2978 = vmul.f32 %v2844, %v2947
        %v2979 = vmul.f32 %v2845, %v2947
        %v2980 = vld [vmem:[%s411] sm:$0x1]
        %v2982 = vperm.slane %v2980, 0
        %v2984 = vmul.f32 %v2948, %v2982
        %v2985 = vmul.f32 %v2949, %v2982
        %v2986 = vmul.f32 %v2950, %v2982
        %v2987 = vmul.f32 %v2951, %v2982
        %v2988 = vmul.f32 %v2952, %v2982
        %v2989 = vmul.f32 %v2953, %v2982
        %v2990 = vmul.f32 %v2954, %v2982
        %v2991 = vmul.f32 %v2955, %v2982
        %v2992 = vmul.f32 %v2956, %v2982
        %v2993 = vmul.f32 %v2957, %v2982
        %v2994 = vmul.f32 %v2958, %v2982
        %v2995 = vmul.f32 %v2959, %v2982
        %v2996 = vmul.f32 %v2960, %v2982
        %v2997 = vmul.f32 %v2961, %v2982
        %v2998 = vmul.f32 %v2962, %v2982
        %v2999 = vmul.f32 %v2963, %v2982
        %v3000 = vmul.f32 %v2964, %v2982
        %v3001 = vmul.f32 %v2965, %v2982
        %v3002 = vmul.f32 %v2966, %v2982
        %v3003 = vmul.f32 %v2967, %v2982
        %v3004 = vmul.f32 %v2968, %v2982
        %v3005 = vmul.f32 %v2969, %v2982
        %v3006 = vmul.f32 %v2970, %v2982
        %v3007 = vmul.f32 %v2971, %v2982
        %v3008 = vmul.f32 %v2972, %v2982
        %v3009 = vmul.f32 %v2973, %v2982
        %v3010 = vmul.f32 %v2974, %v2982
        %v3011 = vmul.f32 %v2975, %v2982
        %v3012 = vmul.f32 %v2976, %v2982
        %v3013 = vmul.f32 %v2977, %v2982
        %v3014 = vmul.f32 %v2978, %v2982
        %v3015 = vmul.f32 %v2979, %v2982
        %v3016 = vld [vmem:[%s414] sm:$0x1]
        %v3018 = vperm.slane %v3016, 0
        %v3020 = vadd.f32 %v2984, %v3018
        %v3021 = vadd.f32 %v2985, %v3018
        %v3022 = vadd.f32 %v2986, %v3018
        %v3023 = vadd.f32 %v2987, %v3018
        %v3024 = vadd.f32 %v2988, %v3018
        %v3025 = vadd.f32 %v2989, %v3018
        %v3026 = vadd.f32 %v2990, %v3018
        %v3027 = vadd.f32 %v2991, %v3018
        %v3028 = vadd.f32 %v2992, %v3018
        %v3029 = vadd.f32 %v2993, %v3018
        %v3030 = vadd.f32 %v2994, %v3018
        %v3031 = vadd.f32 %v2995, %v3018
        %v3032 = vadd.f32 %v2996, %v3018
        %v3033 = vadd.f32 %v2997, %v3018
        %v3034 = vadd.f32 %v2998, %v3018
        %v3035 = vadd.f32 %v2999, %v3018
        %v3036 = vadd.f32 %v3000, %v3018
        %v3037 = vadd.f32 %v3001, %v3018
        %v3038 = vadd.f32 %v3002, %v3018
        %v3039 = vadd.f32 %v3003, %v3018
        %v3040 = vadd.f32 %v3004, %v3018
        %v3041 = vadd.f32 %v3005, %v3018
        %v3042 = vadd.f32 %v3006, %v3018
        %v3043 = vadd.f32 %v3007, %v3018
        %v3044 = vadd.f32 %v3008, %v3018
        %v3045 = vadd.f32 %v3009, %v3018
        %v3046 = vadd.f32 %v3010, %v3018
        %v3047 = vadd.f32 %v3011, %v3018
        %v3048 = vadd.f32 %v3012, %v3018
        %v3049 = vadd.f32 %v3013, %v3018
        %v3050 = vadd.f32 %v3014, %v3018
        %v3051 = vadd.f32 %v3015, %v3018
        %v3052 = vld [vmem:[%s420] sm:$0x1]
        %v3053 = vadd.f32 %v3052, 1.0
        %v3055 = vperm.slane %v3053, 0
        %v3057 = vmul.f32 %v3020, %v3055
        %v3058 = vmul.f32 %v3021, %v3055
        %v3059 = vmul.f32 %v3022, %v3055
        %v3060 = vmul.f32 %v3023, %v3055
        %v3061 = vmul.f32 %v3024, %v3055
        %v3062 = vmul.f32 %v3025, %v3055
        %v3063 = vmul.f32 %v3026, %v3055
        %v3064 = vmul.f32 %v3027, %v3055
        %v3065 = vmul.f32 %v3028, %v3055
        %v3066 = vmul.f32 %v3029, %v3055
        %v3067 = vmul.f32 %v3030, %v3055
        %v3068 = vmul.f32 %v3031, %v3055
        %v3069 = vmul.f32 %v3032, %v3055
        %v3070 = vmul.f32 %v3033, %v3055
        %v3071 = vmul.f32 %v3034, %v3055
        %v3072 = vmul.f32 %v3035, %v3055
        %v3073 = vmul.f32 %v3036, %v3055
        %v3074 = vmul.f32 %v3037, %v3055
        %v3075 = vmul.f32 %v3038, %v3055
        %v3076 = vmul.f32 %v3039, %v3055
        %v3077 = vmul.f32 %v3040, %v3055
        %v3078 = vmul.f32 %v3041, %v3055
        %v3079 = vmul.f32 %v3042, %v3055
        %v3080 = vmul.f32 %v3043, %v3055
        %v3081 = vmul.f32 %v3044, %v3055
        %v3082 = vmul.f32 %v3045, %v3055
        %v3083 = vmul.f32 %v3046, %v3055
        %v3084 = vmul.f32 %v3047, %v3055
        %v3085 = vmul.f32 %v3048, %v3055
        %v3086 = vmul.f32 %v3049, %v3055
        %v3087 = vmul.f32 %v3050, %v3055
        %v3088 = vmul.f32 %v3051, %v3055
        %v3089 = vld [vmem:[%s426] sm:$0x1]
        %v3091 = vperm.slane %v3089, 0
        %v3093 = vadd.f32 %v3057, %v3091
        %v3094 = vadd.f32 %v3058, %v3091
        %v3095 = vadd.f32 %v3059, %v3091
        %v3096 = vadd.f32 %v3060, %v3091
        %v3097 = vadd.f32 %v3061, %v3091
        %v3098 = vadd.f32 %v3062, %v3091
        %v3099 = vadd.f32 %v3063, %v3091
        %v3100 = vadd.f32 %v3064, %v3091
        %v3101 = vadd.f32 %v3065, %v3091
        %v3102 = vadd.f32 %v3066, %v3091
        %v3103 = vadd.f32 %v3067, %v3091
        %v3104 = vadd.f32 %v3068, %v3091
        %v3105 = vadd.f32 %v3069, %v3091
        %v3106 = vadd.f32 %v3070, %v3091
        %v3107 = vadd.f32 %v3071, %v3091
        %v3108 = vadd.f32 %v3072, %v3091
        %v3109 = vadd.f32 %v3073, %v3091
        %v3110 = vadd.f32 %v3074, %v3091
        %v3111 = vadd.f32 %v3075, %v3091
        %v3112 = vadd.f32 %v3076, %v3091
        %v3113 = vadd.f32 %v3077, %v3091
        %v3114 = vadd.f32 %v3078, %v3091
        %v3115 = vadd.f32 %v3079, %v3091
        %v3116 = vadd.f32 %v3080, %v3091
        %v3117 = vadd.f32 %v3081, %v3091
        %v3118 = vadd.f32 %v3082, %v3091
        %v3119 = vadd.f32 %v3083, %v3091
        %v3120 = vadd.f32 %v3084, %v3091
        %v3121 = vadd.f32 %v3085, %v3091
        %v3122 = vadd.f32 %v3086, %v3091
        %v3123 = vadd.f32 %v3087, %v3091
        %v3124 = vadd.f32 %v3088, %v3091
        %v3125 = vsub.f32 0.0, %v3093
        %v3126 = vsub.f32 0.0, %v3094
        %v3127 = vsub.f32 0.0, %v3095
        %v3128 = vsub.f32 0.0, %v3096
        %v3129 = vsub.f32 0.0, %v3097
        %v3130 = vsub.f32 0.0, %v3098
        %v3131 = vsub.f32 0.0, %v3099
        %v3132 = vsub.f32 0.0, %v3100
        %v3133 = vsub.f32 0.0, %v3101
        %v3134 = vsub.f32 0.0, %v3102
        %v3135 = vsub.f32 0.0, %v3103
        %v3136 = vsub.f32 0.0, %v3104
        %v3137 = vsub.f32 0.0, %v3105
        %v3138 = vsub.f32 0.0, %v3106
        %v3139 = vsub.f32 0.0, %v3107
        %v3140 = vsub.f32 0.0, %v3108
        %v3141 = vsub.f32 0.0, %v3109
        %v3142 = vsub.f32 0.0, %v3110
        %v3143 = vsub.f32 0.0, %v3111
        %v3144 = vsub.f32 0.0, %v3112
        %v3145 = vsub.f32 0.0, %v3113
        %v3146 = vsub.f32 0.0, %v3114
        %v3147 = vsub.f32 0.0, %v3115
        %v3148 = vsub.f32 0.0, %v3116
        %v3149 = vsub.f32 0.0, %v3117
        %v3150 = vsub.f32 0.0, %v3118
        %v3151 = vsub.f32 0.0, %v3119
        %v3152 = vsub.f32 0.0, %v3120
        %v3153 = vsub.f32 0.0, %v3121
        %v3154 = vsub.f32 0.0, %v3122
        %v3155 = vsub.f32 0.0, %v3123
        %v3156 = vsub.f32 0.0, %v3124
        %v3157 = vmul.f32 %v3125, 1.442695
        %v3158 = vpow.pop %v3157
        %v3159 = vmul.f32 %v3126, 1.442695
        %v3160 = vpow.pop %v3159
        %v3161 = vmul.f32 %v3127, 1.442695
        %v3162 = vpow.pop %v3161
        %v3163 = vmul.f32 %v3128, 1.442695
        %v3164 = vpow.pop %v3163
        %v3165 = vmul.f32 %v3129, 1.442695
        %v3166 = vpow.pop %v3165
        %v3167 = vmul.f32 %v3130, 1.442695
        %v3168 = vpow.pop %v3167
        %v3169 = vmul.f32 %v3131, 1.442695
        %v3170 = vpow.pop %v3169
        %v3171 = vmul.f32 %v3132, 1.442695
        %v3172 = vpow.pop %v3171
        %v3173 = vmul.f32 %v3133, 1.442695
        %v3174 = vpow.pop %v3173
        %v3175 = vmul.f32 %v3134, 1.442695
        %v3176 = vpow.pop %v3175
        %v3177 = vmul.f32 %v3135, 1.442695
        %v3178 = vpow.pop %v3177
        %v3179 = vmul.f32 %v3136, 1.442695
        %v3180 = vpow.pop %v3179
        %v3181 = vmul.f32 %v3137, 1.442695
        %v3182 = vpow.pop %v3181
        %v3183 = vmul.f32 %v3138, 1.442695
        %v3184 = vpow.pop %v3183
        %v3185 = vmul.f32 %v3139, 1.442695
        %v3186 = vpow.pop %v3185
        %v3187 = vmul.f32 %v3140, 1.442695
        %v3188 = vpow.pop %v3187
        %v3189 = vmul.f32 %v3141, 1.442695
        %v3190 = vpow.pop %v3189
        %v3191 = vmul.f32 %v3142, 1.442695
        %v3192 = vpow.pop %v3191
        %v3193 = vmul.f32 %v3143, 1.442695
        %v3194 = vpow.pop %v3193
        %v3195 = vmul.f32 %v3144, 1.442695
        %v3196 = vpow.pop %v3195
        %v3197 = vmul.f32 %v3145, 1.442695
        %v3198 = vpow.pop %v3197
        %v3199 = vmul.f32 %v3146, 1.442695
        %v3200 = vpow.pop %v3199
        %v3201 = vmul.f32 %v3147, 1.442695
        %v3202 = vpow.pop %v3201
        %v3203 = vmul.f32 %v3148, 1.442695
        %v3204 = vpow.pop %v3203
        %v3205 = vmul.f32 %v3149, 1.442695
        %v3206 = vpow.pop %v3205
        %v3207 = vmul.f32 %v3150, 1.442695
        %v3208 = vpow.pop %v3207
        %v3209 = vmul.f32 %v3151, 1.442695
        %v3210 = vpow.pop %v3209
        %v3211 = vmul.f32 %v3152, 1.442695
        %v3212 = vpow.pop %v3211
        %v3213 = vmul.f32 %v3153, 1.442695
        %v3214 = vpow.pop %v3213
        %v3215 = vmul.f32 %v3154, 1.442695
        %v3216 = vpow.pop %v3215
        %v3217 = vmul.f32 %v3155, 1.442695
        %v3218 = vpow.pop %v3217
        %v3219 = vmul.f32 %v3156, 1.442695
        %v3220 = vpow.pop %v3219
        %v3221 = vadd.f32 %v3158, 1.0
        %v3222 = vadd.f32 %v3160, 1.0
        %v3223 = vadd.f32 %v3162, 1.0
        %v3224 = vadd.f32 %v3164, 1.0
        %v3225 = vadd.f32 %v3166, 1.0
        %v3226 = vadd.f32 %v3168, 1.0
        %v3227 = vadd.f32 %v3170, 1.0
        %v3228 = vadd.f32 %v3172, 1.0
        %v3229 = vadd.f32 %v3174, 1.0
        %v3230 = vadd.f32 %v3176, 1.0
        %v3231 = vadd.f32 %v3178, 1.0
        %v3232 = vadd.f32 %v3180, 1.0
        %v3233 = vadd.f32 %v3182, 1.0
        %v3234 = vadd.f32 %v3184, 1.0
        %v3235 = vadd.f32 %v3186, 1.0
        %v3236 = vadd.f32 %v3188, 1.0
        %v3237 = vadd.f32 %v3190, 1.0
        %v3238 = vadd.f32 %v3192, 1.0
        %v3239 = vadd.f32 %v3194, 1.0
        %v3240 = vadd.f32 %v3196, 1.0
        %v3241 = vadd.f32 %v3198, 1.0
        %v3242 = vadd.f32 %v3200, 1.0
        %v3243 = vadd.f32 %v3202, 1.0
        %v3244 = vadd.f32 %v3204, 1.0
        %v3245 = vadd.f32 %v3206, 1.0
        %v3246 = vadd.f32 %v3208, 1.0
        %v3247 = vadd.f32 %v3210, 1.0
        %v3248 = vadd.f32 %v3212, 1.0
        %v3249 = vadd.f32 %v3214, 1.0
        %v3250 = vadd.f32 %v3216, 1.0
        %v3251 = vadd.f32 %v3218, 1.0
        %v3252 = vadd.f32 %v3220, 1.0
        %v3253 = vrcp.pop %v3221
        %v3254 = vrcp.pop %v3222
        %v3255 = vrcp.pop %v3223
        %v3256 = vrcp.pop %v3224
        %v3257 = vrcp.pop %v3225
        %v3258 = vrcp.pop %v3226
        %v3259 = vrcp.pop %v3227
        %v3260 = vrcp.pop %v3228
        %v3261 = vrcp.pop %v3229
        %v3262 = vrcp.pop %v3230
        %v3263 = vrcp.pop %v3231
        %v3264 = vrcp.pop %v3232
        %v3265 = vrcp.pop %v3233
        %v3266 = vrcp.pop %v3234
        %v3267 = vrcp.pop %v3235
        %v3268 = vrcp.pop %v3236
        %v3269 = vrcp.pop %v3237
        %v3270 = vrcp.pop %v3238
        %v3271 = vrcp.pop %v3239
        %v3272 = vrcp.pop %v3240
        %v3273 = vrcp.pop %v3241
        %v3274 = vrcp.pop %v3242
        %v3275 = vrcp.pop %v3243
        %v3276 = vrcp.pop %v3244
        %v3277 = vrcp.pop %v3245
        %v3278 = vrcp.pop %v3246
        %v3279 = vrcp.pop %v3247
        %v3280 = vrcp.pop %v3248
        %v3281 = vrcp.pop %v3249
        %v3282 = vrcp.pop %v3250
        %v3283 = vrcp.pop %v3251
        %v3284 = vrcp.pop %v3252
        %v3285 = vmul.f32 %v3093, %v3253
        %v3286 = vmul.f32 %v3094, %v3254
        %v3287 = vmul.f32 %v3095, %v3255
        %v3288 = vmul.f32 %v3096, %v3256
        %v3289 = vmul.f32 %v3097, %v3257
        %v3290 = vmul.f32 %v3098, %v3258
        %v3291 = vmul.f32 %v3099, %v3259
        %v3292 = vmul.f32 %v3100, %v3260
        %v3293 = vmul.f32 %v3101, %v3261
        %v3294 = vmul.f32 %v3102, %v3262
        %v3295 = vmul.f32 %v3103, %v3263
        %v3296 = vmul.f32 %v3104, %v3264
        %v3297 = vmul.f32 %v3105, %v3265
        %v3298 = vmul.f32 %v3106, %v3266
        %v3299 = vmul.f32 %v3107, %v3267
        %v3300 = vmul.f32 %v3108, %v3268
        %v3301 = vmul.f32 %v3109, %v3269
        %v3302 = vmul.f32 %v3110, %v3270
        %v3303 = vmul.f32 %v3111, %v3271
        %v3304 = vmul.f32 %v3112, %v3272
        %v3305 = vmul.f32 %v3113, %v3273
        %v3306 = vmul.f32 %v3114, %v3274
        %v3307 = vmul.f32 %v3115, %v3275
        %v3308 = vmul.f32 %v3116, %v3276
        %v3309 = vmul.f32 %v3117, %v3277
        %v3310 = vmul.f32 %v3118, %v3278
        %v3311 = vmul.f32 %v3119, %v3279
        %v3312 = vmul.f32 %v3120, %v3280
        %v3313 = vmul.f32 %v3121, %v3281
        %v3314 = vmul.f32 %v3122, %v3282
        %v3315 = vmul.f32 %v3123, %v3283
        %v3316 = vmul.f32 %v3124, %v3284
        %3317 = vst [vmem:[%s396] sm:$0xff] %v3285
        %3318 = vst [vmem:[%s396 + $0x8] sm:$0xff] %v3286
        %3319 = vst [vmem:[%s396 + $0x10] sm:$0xff] %v3287
        %3320 = vst [vmem:[%s396 + $0x18] sm:$0xff] %v3288
        %3321 = vst [vmem:[%s396 + $0x20] sm:$0xff] %v3289
        %3322 = vst [vmem:[%s396 + $0x28] sm:$0xff] %v3290
        %3323 = vst [vmem:[%s396 + $0x30] sm:$0xff] %v3291
        %3324 = vst [vmem:[%s396 + $0x38] sm:$0xff] %v3292
        %3325 = vst [vmem:[%s396 + $0x40] sm:$0xff] %v3293
        %3326 = vst [vmem:[%s396 + $0x48] sm:$0xff] %v3294
        %3327 = vst [vmem:[%s396 + $0x50] sm:$0xff] %v3295
        %3328 = vst [vmem:[%s396 + $0x58] sm:$0xff] %v3296
        %3329 = vst [vmem:[%s396 + $0x60] sm:$0xff] %v3297
        %3330 = vst [vmem:[%s396 + $0x68] sm:$0xff] %v3298
        %3331 = vst [vmem:[%s396 + $0x70] sm:$0xff] %v3299
        %3332 = vst [vmem:[%s396 + $0x78] sm:$0xff] %v3300
        %3333 = vst [vmem:[%s396 + $0x80] sm:$0xff] %v3301
        %3334 = vst [vmem:[%s396 + $0x88] sm:$0xff] %v3302
        %3335 = vst [vmem:[%s396 + $0x90] sm:$0xff] %v3303
        %3336 = vst [vmem:[%s396 + $0x98] sm:$0xff] %v3304
        %3337 = vst [vmem:[%s396 + $0xa0] sm:$0xff] %v3305
        %3338 = vst [vmem:[%s396 + $0xa8] sm:$0xff] %v3306
        %3339 = vst [vmem:[%s396 + $0xb0] sm:$0xff] %v3307
        %3340 = vst [vmem:[%s396 + $0xb8] sm:$0xff] %v3308
        %3341 = vst [vmem:[%s396 + $0xc0] sm:$0xff] %v3309
        %3342 = vst [vmem:[%s396 + $0xc8] sm:$0xff] %v3310
        %3343 = vst [vmem:[%s396 + $0xd0] sm:$0xff] %v3311
        %3344 = vst [vmem:[%s396 + $0xd8] sm:$0xff] %v3312
        %3345 = vst [vmem:[%s396 + $0xe0] sm:$0xff] %v3313
        %3346 = vst [vmem:[%s396 + $0xe8] sm:$0xff] %v3314
        %3347 = vst [vmem:[%s396 + $0xf0] sm:$0xff] %v3315
        %3348 = vst [vmem:[%s396 + $0xf8] sm:$0xff] %v3316
        %s3349 = sand.u32 %s251, 1
        %s3350 = scalar_lea.sflag [#allocation3], %s3349
        %s3351 = sand.u32 %s251, 1
        %s3352 = smul.addr %s3351, 256
        %s3353 = scalar_lea.vmem [#allocation2], %s3352
        // Predicated region
        $region53: #{block_forward.1} parent=51 // pred_check
          %p3354 = pneg %p261
        $region54: #{block_forward.1} parent=51 // pred_check_branch
          %3356 = sbr.rel (%p3354) target = $region56
        $region55: #{block_forward.1} parent=51 // pred_region
          %3358 = vsyncadd %s3350, 0
          %s3359 = smul.addr %s26, 32
          %s3360 = sadd.s32 %s27, %s3359
          %s3361 = smul.addr %s3360, 8
          %s3362 = scalar_lea.hbm %s8, %s3361
          %s3363 = sshll.u32 %s3353, 4
          %s3364 = int_to_ptr.vmem [resolvable:$true] %s3363
          %s3365 = sshll.u32 %s3362, 4
          %s3366 = int_to_ptr.hbm [resolvable:$true] %s3365
          %3371 = dma.vmem_to_hbm [thread:$0]  %s3364, 4096, %s3366, %s3350, 128, 128, 8
        $region56: #{block_forward.1} parent=51 // pred_fallthru
          _
      $region52: #{block_forward.1} parent=5 // pred_fallthru
        _
      %p3372 = scmp.le.s32.totalorder 2, %s17
      // Predicated region
      $region57: #{block_forward.1} parent=5 // pred_check
        %p3373 = pneg %p3372
      $region58: #{block_forward.1} parent=5 // pred_check_branch
        %3375 = sbr.rel (%p3373) target = $region60
      $region59: #{block_forward.1} parent=5 // pred_region
        %s3376 = ssub.s32 %s17, 2
        // Predicated region
        $region61: #{block_forward.1} parent=59 // pred_check
          %p3377 = pneg %p267
        $region62: #{block_forward.1} parent=59 // pred_check_branch
          %3379 = sbr.rel (%p3377) target = $region64
        $region63: #{block_forward.1} parent=59 // pred_region
          %s3380 = sand.u32 %s252, 1
          %s3381 = scalar_lea.sflag [#allocation3], %s3380
          %s3382 = sand.u32 %s252, 1
          %s3383 = smul.addr %s3382, 256
          %s3384 = scalar_lea.vmem [#allocation2], %s3383
          %3386 = dma.done %s3381, 4096
        $region64: #{block_forward.1} parent=59 // pred_fallthru
          _
      $region60: #{block_forward.1} parent=5 // pred_fallthru
        _
    $region6: #{block_forward.1} parent=1 // loop_footer
      %s21 = sadd.s32 1, %s17
    $region7: #{block_forward.1} parent=1 // loop_footer_branch
      %16 = sbr.rel target = $region3
    $region8: #{block_forward.1} parent=1 // loop_exit
      _
    %3387 = vsyncpa [#allocation3], 1
    %s3388 = scalar_lea.sflag [#allocation3], 1
    %3389 = vsyncpa %s3388, 1

</llo_original>
